<compile_context>
chip_gen: v7x
topology: tpu7x:2x2x1
jax: 0.10.0
libtpu: 0.0.40
codegen_flags: <defaults>
</compile_context>

<pallas_src>
from functools import partial

import jax
import jax.numpy as jnp
from jax import lax
from jax.experimental import pallas as pl
from jax.experimental.pallas import tpu as pltpu


def _round_up(x, m):
    return -(-x // m) * m


def _vmem_budget_bytes():
    """Generation-aware VMEM budget (leaves headroom for compiler scratch)."""
    try:
        cap = int(pltpu.get_tpu_info().vmem_capacity_bytes)
    except Exception:
        cap = 128 * 1024 * 1024
    return max(32 * 1024 * 1024, min(int(cap * 0.8), 112 * 1024 * 1024))


_VMEM_BUDGET = _vmem_budget_bytes()


def _choose_tile(n, candidates, fits=None):
    """Largest fitting candidate; prefer an exact divisor of n when comparable."""
    cap = max(8, _round_up(n, 8))
    ok = [c for c in candidates if c <= cap and (fits is None or fits(c))]
    if not ok:
        return 8
    best = ok[0]
    for c in ok:
        if n % c == 0 and c * 2 >= best:
            return c
    return best


# ---------------------------------------------------------------------------
# Kernel 1: fused q/k/v projection + lane-dense RoPE epilogue
# ---------------------------------------------------------------------------
def _apply_rope_fullwidth(raw_f32, cos_t, sin_t, head_dim):
    """RoPE on a (rows, n_heads*head_dim) lane-major slab.

    cos_t / sin_t are per-head tiled tables [cos, cos] / [-sin, sin] (the
    rotate-half sign is folded into the sin table).  The half-swap within each
    head is built from two full-width lane rolls + a lane select, so the whole
    epilogue is lane-dense element-wise work hidden under the MXU.
    """
    width = raw_f32.shape[-1]
    half = head_dim // 2
    fwd = jnp.roll(raw_f32, -half, axis=-1)   # [j] <- raw[j + half]
    bwd = jnp.roll(raw_f32, half, axis=-1)    # [j] <- raw[j - half]
    lane = lax.broadcasted_iota(jnp.int32, raw_f32.shape, 1)
    swapped = jnp.where((lane % head_dim) < half, fwd, bwd)
    return raw_f32 * cos_t + swapped * sin_t


def _qkv_rope_kernel(x_ref, wq_ref, wk_ref, wv_ref, cos_ref, sin_ref,
                     q_ref, k_ref, v_ref, *, head_dim):
    x = x_ref[...]                                   # (tm, D) bf16
    cos_t = cos_ref[...]                             # (tm, Nq*H) f32
    sin_t = sin_ref[...]
    k_width = k_ref.shape[-1]

    # Interleave matmul -> epilogue -> store per projection (short live ranges).
    q_raw = jnp.dot(x, wq_ref[...], preferred_element_type=jnp.float32)
    q_ref[...] = _apply_rope_fullwidth(q_raw, cos_t, sin_t,
                                       head_dim).astype(q_ref.dtype)

    k_raw = jnp.dot(x, wk_ref[...], preferred_element_type=jnp.float32)
    k_ref[...] = _apply_rope_fullwidth(k_raw, cos_t[:, :k_width],
                                       sin_t[:, :k_width],
                                       head_dim).astype(k_ref.dtype)

    v_ref[...] = jnp.dot(x, wv_ref[...],
                         preferred_element_type=jnp.float32).astype(v_ref.dtype)


def qkv_rope_proj(x2d, wq, wk, wv, cos_t, sin_t, *, head_dim):
    M, D = x2d.shape
    wq_width = wq.shape[1]
    wk_width = wk.shape[1]

    # Weights are double-buffered by default even with a constant index_map.
    fixed = (wq_width + 2 * wk_width) * D * 2 * 2
    per_row = (D * 2 + 2 * wq_width * 4 + 2 * (wq_width + 2 * wk_width) * 2) * 2

    def fits(tm):
        return fixed + tm * per_row <= 0.7 * _VMEM_BUDGET

    tm = _choose_tile(M, (512, 256, 128, 64, 32, 16, 8), fits)
    Mp = _round_up(M, tm)
    if Mp != M:
        pad = ((0, Mp - M), (0, 0))
        x2d = jnp.pad(x2d, pad)
        cos_t = jnp.pad(cos_t, pad)
        sin_t = jnp.pad(sin_t, pad)

    q, k, v = pl.pallas_call(
        partial(_qkv_rope_kernel, head_dim=head_dim),
        out_shape=(
            jax.ShapeDtypeStruct((Mp, wq_width), jnp.bfloat16),
            jax.ShapeDtypeStruct((Mp, wk_width), jnp.bfloat16),
            jax.ShapeDtypeStruct((Mp, wk_width), jnp.bfloat16),
        ),
        grid=(Mp // tm,),
        in_specs=[
            pl.BlockSpec((tm, D), lambda i: (i, 0)),
            pl.BlockSpec((D, wq_width), lambda i: (0, 0)),
            pl.BlockSpec((D, wk_width), lambda i: (0, 0)),
            pl.BlockSpec((D, wk_width), lambda i: (0, 0)),
            pl.BlockSpec((tm, wq_width), lambda i: (i, 0)),
            pl.BlockSpec((tm, wq_width), lambda i: (i, 0)),
        ],
        out_specs=(
            pl.BlockSpec((tm, wq_width), lambda i: (i, 0)),
            pl.BlockSpec((tm, wk_width), lambda i: (i, 0)),
            pl.BlockSpec((tm, wk_width), lambda i: (i, 0)),
        ),
        compiler_params=pltpu.CompilerParams(
            dimension_semantics=("parallel",), vmem_limit_bytes=_VMEM_BUDGET),
    )(x2d, wq, wk, wv, cos_t, sin_t)
    if Mp != M:
        q, k, v = q[:M], k[:M], v[:M]
    return q, k, v


# ---------------------------------------------------------------------------
# Kernel 2: flash-style GQA attention (scale=1.0, optional causal)
# ---------------------------------------------------------------------------
def _flash_gqa_kernel(q_ref, k_ref, v_ref, o_ref, qg_ref, m_ref, l_ref, acc_ref,
                      *, nq, nkv, head_dim, tq, tk, causal, kv_valid):
    g = nq // nkv
    H = head_dim
    qt = pl.program_id(1)
    kt = pl.program_id(2)

    @pl.when(kt == 0)
    def _init():
        m_ref[...] = jnp.full(m_ref.shape, -jnp.inf, dtype=jnp.float32)
        l_ref[...] = jnp.zeros(l_ref.shape, dtype=jnp.float32)
        acc_ref[...] = jnp.zeros(acc_ref.shape, dtype=jnp.float32)
        # Re-pack Q from lane-major (tq, Nq*H) to head-stacked (g*tq, H) per KV
        # head once per (b, q-tile) so the hot kv loop issues ONE batched
        # matmul per KV head instead of g small per-head matmuls.
        q2d = q_ref[...]
        for kv in range(nkv):
            qg_ref[kv] = jnp.concatenate(
                [q2d[:, (kv * g + gi) * H:(kv * g + gi + 1) * H]
                 for gi in range(g)], axis=0)

    def _compute():
        k2d = k_ref[...]                              # (tk, Nkv*H) bf16
        v2d = v_ref[...]
        rows = g * tq
        mask = None
        if causal or (kv_valid is not None):
            col_tok = kt * tk + lax.broadcasted_iota(jnp.int32, (rows, tk), 1)
            if causal:
                row_tok = qt * tq + (
                    lax.broadcasted_iota(jnp.int32, (rows, tk), 0) % tq)
                mask = col_tok <= row_tok
                if kv_valid is not None:
                    mask = jnp.logical_and(mask, col_tok < kv_valid)
            else:
                mask = col_tok < kv_valid

        for kv in range(nkv):
            k_n = k2d[:, kv * H:(kv + 1) * H]         # (tk, H) lane slice
            v_n = v2d[:, kv * H:(kv + 1) * H]
            q_g = qg_ref[kv]                          # (g*tq, H) bf16
            # scale == 1.0 in the reference forward -> no score multiply.
            s = lax.dot_general(q_g, k_n, (((1,), (1,)), ((), ())),
                                preferred_element_type=jnp.float32)
            if mask is not None:
                s = jnp.where(mask, s, -jnp.inf)
            m_prev = m_ref[kv]
            m_new = jnp.maximum(m_prev, jnp.max(s, axis=-1, keepdims=True))
            alpha = jnp.exp(m_prev - m_new)
            p = jnp.exp(s - m_new)
            l_ref[kv] = alpha * l_ref[kv] + jnp.sum(p, axis=-1, keepdims=True)
            acc_ref[kv] = alpha * acc_ref[kv] + lax.dot_general(
                p.astype(v_n.dtype), v_n, (((1,), (0,)), ((), ())),
                preferred_element_type=jnp.float32)
            m_ref[kv] = m_new

    if causal:
        # Fully-masked kv tiles: compute skipped here; their DMA is avoided via
        # the clamped kv index_map in the wrapper.
        pl.when(kt * tk <= qt * tq + tq - 1)(_compute)
    else:
        _compute()

    @pl.when(kt == pl.num_programs(2) - 1)
    def _finalize():
        pieces = []
        for kv in range(nkv):
            inv = pl.reciprocal(l_ref[kv])            # exact; off the hot path
            outv = acc_ref[kv] * inv                  # (g*tq, H)
            for gi in range(g):
                pieces.append(outv[gi * tq:(gi + 1) * tq, :])
        # single lane-dense (tq, Nq*H) store
        o_ref[...] = jnp.concatenate(pieces, axis=-1).astype(o_ref.dtype)


def _attn_tile_sizes(T, S, nq, nkv, head_dim, budget):
    g = nq // nkv
    H = head_dim

    def fits(tq, tk):
        blocks = 2 * (2 * tq * nq * H * 2) + 2 * (2 * tk * nkv * H * 2)
        scratch = nq * tq * H * 2 + nq * tq * H * 4 + 2 * nq * tq * 128 * 4
        temps = 2 * g * tq * tk * 4
        return blocks + scratch + temps <= 0.6 * budget

    cands = (512, 256, 128, 64, 32, 16, 8)
    q_cap = max(8, _round_up(T, 8))
    k_cap = max(8, _round_up(S, 8))
    for tq in cands:
        if tq > q_cap:
            continue
        for tk in cands:
            if tk > k_cap:
                continue
            if fits(tq, tk):
                return tq, tk
    return 8, 8


def flash_gqa_attention(q, k, v, *, nq, nkv, head_dim, is_causal):
    B, T, _ = q.shape
    _, S, _ = k.shape
    H = head_dim
    g = nq // nkv
    tq, tk = _attn_tile_sizes(T, S, nq, nkv, H, _VMEM_BUDGET)
    Tp, Sp = _round_up(T, tq), _round_up(S, tk)
    if Tp != T:
        q = jnp.pad(q, ((0, 0), (0, Tp - T), (0, 0)))
    if Sp != S:
        k = jnp.pad(k, ((0, 0), (0, Sp - S), (0, 0)))
        v = jnp.pad(v, ((0, 0), (0, Sp - S), (0, 0)))
    kv_valid = S if Sp != S else None

    if is_causal:
        def kv_index(b, qt, kt):
            last = (qt * tq + tq - 1) // tk
            return (b, jnp.minimum(kt, last), 0)
    else:
        def kv_index(b, qt, kt):
            return (b, kt, 0)

    kernel = partial(_flash_gqa_kernel, nq=nq, nkv=nkv, head_dim=H,
                     tq=tq, tk=tk, causal=is_causal, kv_valid=kv_valid)
    out = pl.pallas_call(
        kernel,
        out_shape=jax.ShapeDtypeStruct((B, Tp, nq * H), jnp.bfloat16),
        grid=(B, Tp // tq, Sp // tk),
        in_specs=[
            pl.BlockSpec((None, tq, nq * H), lambda b, qt, kt: (b, qt, 0)),
            pl.BlockSpec((None, tk, nkv * H), kv_index),
            pl.BlockSpec((None, tk, nkv * H), kv_index),
        ],
        out_specs=pl.BlockSpec((None, tq, nq * H), lambda b, qt, kt: (b, qt, 0)),
        scratch_shapes=[
            pltpu.VMEM((nkv, g * tq, H), jnp.bfloat16),   # re-packed Q
            pltpu.VMEM((nkv, g * tq, 1), jnp.float32),    # running max
            pltpu.VMEM((nkv, g * tq, 1), jnp.float32),    # running denom
            pltpu.VMEM((nkv, g * tq, H), jnp.float32),    # output accumulator
        ],
        compiler_params=pltpu.CompilerParams(
            dimension_semantics=("parallel", "parallel", "arbitrary"),
            vmem_limit_bytes=_VMEM_BUDGET),
    )(q, k, v)
    if Tp != T:
        out = out[:, :T]
    return out


# ---------------------------------------------------------------------------
# Kernel 3: tiled 2-D matmul (o_proj), weight resident across M tiles
# ---------------------------------------------------------------------------
def _matmul_kernel(x_ref, w_ref, o_ref):
    o_ref[...] = jnp.dot(x_ref[...], w_ref[...],
                         preferred_element_type=jnp.float32).astype(o_ref.dtype)


def dense_2d(x, w, out_dtype):
    # TODO(synk): tile the K (contraction) dim with an accumulator for very large K.
    M, K = x.shape
    K2, N = w.shape
    assert K == K2
    out_bytes = jnp.dtype(out_dtype).itemsize

    if K * N * 2 <= _VMEM_BUDGET // 3:
        tn = N                      # W fully resident, streamed from HBM once
    else:
        tn = _choose_tile(N, (2048, 1024, 512, 256, 128))

    def fits(tm):
        return (2 * tm * K * 2 + 2 * tm * tn * out_bytes
                + 2 * K * tn * 2 + tm * tn * 4) <= 0.8 * _VMEM_BUDGET

    tm = _choose_tile(M, (1024, 512, 256, 128, 64, 32, 16, 8), fits)

    Mp, Np = _round_up(M, tm), _round_up(N, tn)
    if Mp != M:
        x = jnp.pad(x, ((0, Mp - M), (0, 0)))
    if Np != N:
        w = jnp.pad(w, ((0, 0), (0, Np - N)))

    # N-tile axis outermost -> the weight block index is constant across the
    # inner M-tile axis, so W is not re-streamed per row tile.
    out = pl.pallas_call(
        _matmul_kernel,
        out_shape=jax.ShapeDtypeStruct((Mp, Np), out_dtype),
        grid=(Np // tn, Mp // tm),
        in_specs=[
            pl.BlockSpec((tm, K), lambda j, i: (i, 0)),
            pl.BlockSpec((K, tn), lambda j, i: (0, j)),
        ],
        out_specs=pl.BlockSpec((tm, tn), lambda j, i: (i, j)),
        compiler_params=pltpu.CompilerParams(
            dimension_semantics=("parallel", "parallel"),
            vmem_limit_bytes=_VMEM_BUDGET),
    )(x, w)
    if Mp != M or Np != N:
        out = out[:M, :N]
    return out


# ---------------------------------------------------------------------------
# SelfAttention module equivalent (cache=None, self-attention path)
# ---------------------------------------------------------------------------
class SelfAttentionPallas:
    def __init__(self, key, q_embed_dim, kv_embed_dim, num_query_heads,
                 num_kv_heads, head_dim, out_embed_dim=None,
                 rope_min_timescale=1, rope_max_timescale=10000):
        assert num_query_heads % num_kv_heads == 0
        assert head_dim % 2 == 0
        self.Nq, self.Nkv, self.H = num_query_heads, num_kv_heads, head_dim
        self.out_dim = out_embed_dim if out_embed_dim is not None else q_embed_dim

        D, E = q_embed_dim, kv_embed_dim
        k1, k2, k3, k4 = jax.random.split(key, 4)
        s = 0.05
        # f32 "master" weights (DenseGeneral layout: in_shapes + out_features)
        self.wq = (jax.random.normal(k1, (D, self.Nq, head_dim)) * s).astype(jnp.float32)
        self.wk = (jax.random.normal(k2, (E, self.Nkv, head_dim)) * s).astype(jnp.float32)
        self.wv = (jax.random.normal(k3, (E, self.Nkv, head_dim)) * s).astype(jnp.float32)
        self.wo = (jax.random.normal(k4, (self.Nq, head_dim, self.out_dim)) * s).astype(jnp.float32)

        half = head_dim // 2
        frac = 2.0 * jnp.arange(half, dtype=jnp.float32) / head_dim
        self.timescale = (rope_min_timescale *
                          (rope_max_timescale / rope_min_timescale) ** frac
                          ).astype(jnp.float32)

        bf = jnp.bfloat16
        self.wq_b = self.wq.reshape(D, self.Nq * head_dim).astype(bf)
        self.wk_b = self.wk.reshape(E, self.Nkv * head_dim).astype(bf)
        self.wv_b = self.wv.reshape(E, self.Nkv * head_dim).astype(bf)
        self.wo_b = self.wo.reshape(self.Nq * head_dim, self.out_dim).astype(bf)

    def __call__(self, X, q_positions, is_causal=True):
        # kv_positions defaults to q_positions (self-attention path).
        B, T, D = X.shape
        M = B * T
        x2d = X.reshape(M, D).astype(jnp.bfloat16)

        # Lane-dense RoPE tables: per head the pattern is [cos, cos] and
        # [-sin, sin] (rotate-half sign folded into the sin table), pre-tiled
        # across heads in the wrapper so the kernel epilogue is full-width.
        pos = q_positions.astype(jnp.float32).reshape(M, 1)
        sinusoid = pos / self.timescale[None, :]              # (M, H/2)
        sin, cos = jnp.sin(sinusoid), jnp.cos(sinusoid)
        cos_h = jnp.concatenate([cos, cos], axis=-1)          # (M, H)
        sin_h = jnp.concatenate([-sin, sin], axis=-1)         # (M, H)
        cos_t = jnp.tile(cos_h, (1, self.Nq))                 # (M, Nq*H) f32
        sin_t = jnp.tile(sin_h, (1, self.Nq))

        q2d, k2d, v2d = qkv_rope_proj(x2d, self.wq_b, self.wk_b, self.wv_b,
                                      cos_t, sin_t, head_dim=self.H)

        q = q2d.reshape(B, T, self.Nq * self.H)
        k = k2d.reshape(B, T, self.Nkv * self.H)
        v = v2d.reshape(B, T, self.Nkv * self.H)

        attn = flash_gqa_attention(q, k, v, nq=self.Nq, nkv=self.Nkv,
                                   head_dim=self.H, is_causal=is_causal)
        out = dense_2d(attn.reshape(M, self.Nq * self.H), self.wo_b, X.dtype)
        return out.reshape(B, T, self.out_dim)


# ---------------------------------------------------------------------------
# Pure-JAX f32 reference (mirrors the PyTorch forward) for correctness check
# ---------------------------------------------------------------------------
def reference_forward(X, q_positions, mod: SelfAttentionPallas, is_causal=True):
    q = jnp.einsum("btd,dnh->btnh", X, mod.wq)
    k = jnp.einsum("btd,dnh->btnh", X, mod.wk)
    v = jnp.einsum("btd,dnh->btnh", X, mod.wv)
    pos = q_positions.astype(jnp.float32)[:, :, None, None]
    si = pos / mod.timescale
    sin, cos = jnp.sin(si), jnp.cos(si)

    def rope(x):
        h = x.shape[-1] // 2
        f, sec = x[..., :h], x[..., h:]
        return jnp.concatenate([f * cos - sec * sin, sec * cos + f * sin], axis=-1)

    q, k = rope(q), rope(k)
    q = q.transpose(0, 2, 1, 3)
    k = k.transpose(0, 2, 1, 3)
    v = v.transpose(0, 2, 1, 3)
    g = q.shape[1] // k.shape[1]
    k = jnp.repeat(k, g, axis=1)
    v = jnp.repeat(v, g, axis=1)
    scores = jnp.einsum("bnth,bnsh->bnts", q, k) * 1.0
    if is_causal:
        T, S = scores.shape[-2:]
        mask = jnp.tril(jnp.ones((T, S), bool))
        scores = jnp.where(mask, scores, -jnp.inf)
    w = jax.nn.softmax(scores, axis=-1)
    o = jnp.einsum("bnts,bnsh->bnth", w, v).transpose(0, 2, 1, 3)
    return jnp.einsum("btnh,nho->bto", o, mod.wo).astype(X.dtype)


if __name__ == "__main__":
    B, T, D = 2, 64, 128
    num_query_heads, num_kv_heads, head_dim = 4, 2, 128

    key = jax.random.PRNGKey(0)
    k_param, k_x = jax.random.split(key)

    mod = SelfAttentionPallas(
        k_param,
        q_embed_dim=D,
        kv_embed_dim=D,
        num_query_heads=num_query_heads,
        num_kv_heads=num_kv_heads,
        head_dim=head_dim,
    )

    X = jax.random.normal(k_x, (B, T, D), dtype=jnp.float32)
    q_positions = jnp.broadcast_to(jnp.arange(T, dtype=jnp.int32)[None, :], (B, T))

    out_causal = jax.block_until_ready(mod(X, q_positions, is_causal=True))
    out_full = jax.block_until_ready(mod(X, q_positions, is_causal=False))

    ref_causal = reference_forward(X, q_positions, mod, is_causal=True)
    ref_full = reference_forward(X, q_positions, mod, is_causal=False)

    assert out_causal.shape == (B, T, D), out_causal.shape
    # bf16 matmul operands -> widened tolerance vs the f32 reference
    err_c = float(jnp.max(jnp.abs(out_causal - ref_causal)))
    err_f = float(jnp.max(jnp.abs(out_full - ref_full)))
    assert jnp.allclose(out_causal, ref_causal, rtol=3e-2, atol=3e-2), err_c
    assert jnp.allclose(out_full, ref_full, rtol=3e-2, atol=3e-2), err_f

    print("KERNEL_OK")
</pallas_src>

<mosaic_0001>
module attributes {stable_mosaic.version = 11 : i64} {
  func.func @_qkv_rope_kernel(%arg0: i32, %arg1: memref<128x128xbf16, #tpu.memory_space<vmem>>, %arg2: memref<128x512xbf16, #tpu.memory_space<vmem>>, %arg3: memref<128x256xbf16, #tpu.memory_space<vmem>>, %arg4: memref<128x256xbf16, #tpu.memory_space<vmem>>, %arg5: memref<128x512xf32, #tpu.memory_space<vmem>>, %arg6: memref<128x512xf32, #tpu.memory_space<vmem>>, %arg7: memref<128x512xbf16, #tpu.memory_space<vmem>>, %arg8: memref<128x256xbf16, #tpu.memory_space<vmem>>, %arg9: memref<128x256xbf16, #tpu.memory_space<vmem>>) attributes {dimension_semantics = [#tpu.dimension_semantics<parallel>], iteration_bounds = array<i64: 1>, scalar_prefetch = 0 : i64, scratch_operands = 0 : i64, tpu.core_type = #tpu.core_type<tc>, window_params = [{transform_indices = @transform_0, window_bounds = array<i64: 128, 128>}, {pipeline_mode = #tpu.pipeline_mode<synchronous>, transform_indices = @transform_1, window_bounds = array<i64: 128, 512>}, {pipeline_mode = #tpu.pipeline_mode<synchronous>, transform_indices = @transform_2, window_bounds = array<i64: 128, 256>}, {pipeline_mode = #tpu.pipeline_mode<synchronous>, transform_indices = @transform_3, window_bounds = array<i64: 128, 256>}, {transform_indices = @transform_4, window_bounds = array<i64: 128, 512>}, {transform_indices = @transform_5, window_bounds = array<i64: 128, 512>}, {transform_indices = @transform_6, window_bounds = array<i64: 128, 512>}, {transform_indices = @transform_7, window_bounds = array<i64: 128, 256>}, {transform_indices = @transform_8, window_bounds = array<i64: 128, 256>}]} {
    %c0 = arith.constant 0 : index
    %c0_0 = arith.constant 0 : index
    %0 = vector.load %arg1[%c0, %c0_0] : memref<128x128xbf16, #tpu.memory_space<vmem>>, vector<128x128xbf16>
    %c0_1 = arith.constant 0 : index
    %c0_2 = arith.constant 0 : index
    %1 = vector.load %arg5[%c0_1, %c0_2] : memref<128x512xf32, #tpu.memory_space<vmem>>, vector<128x512xf32>
    %c0_3 = arith.constant 0 : index
    %c0_4 = arith.constant 0 : index
    %2 = vector.load %arg6[%c0_3, %c0_4] : memref<128x512xf32, #tpu.memory_space<vmem>>, vector<128x512xf32>
    %c0_5 = arith.constant 0 : index
    %c0_6 = arith.constant 0 : index
    %3 = vector.load %arg2[%c0_5, %c0_6] : memref<128x512xbf16, #tpu.memory_space<vmem>>, vector<128x512xbf16>
    %cst = arith.constant dense<0.000000e+00> : vector<128x512xf32>
    %4 = tpu.matmul %0, %3, %cst {dimension_numbers = #tpu.dot_dimension_numbers<[1], [0], [0], [1], [0, 0, 1, 1], [], []>} : vector<128x128xbf16>, vector<128x512xbf16>, vector<128x512xf32> -> vector<128x512xf32>
    %5 = vector.extract_strided_slice %4 {offsets = [0, 64], sizes = [128, 448], strides = [1, 1]} : vector<128x512xf32> to vector<128x448xf32>
    %6 = vector.extract_strided_slice %4 {offsets = [0, 0], sizes = [128, 64], strides = [1, 1]} : vector<128x512xf32> to vector<128x64xf32>
    %7 = tpu.concatenate %5, %6 in 1 : vector<128x448xf32>, vector<128x64xf32> -> vector<128x512xf32>
    %8 = vector.extract_strided_slice %4 {offsets = [0, 448], sizes = [128, 64], strides = [1, 1]} : vector<128x512xf32> to vector<128x64xf32>
    %9 = vector.extract_strided_slice %4 {offsets = [0, 0], sizes = [128, 448], strides = [1, 1]} : vector<128x512xf32> to vector<128x448xf32>
    %10 = tpu.concatenate %8, %9 in 1 : vector<128x64xf32>, vector<128x448xf32> -> vector<128x512xf32>
    %11 = tpu.iota {dimensions = array<i32: 1>} : vector<128x512xi32>
    %c128_i32 = arith.constant 128 : i32
    %c0_i32 = arith.constant 0 : i32
    %12 = arith.cmpi eq, %c128_i32, %c0_i32 : i32
    %c1_i32 = arith.constant 1 : i32
    %13 = arith.select %12, %c1_i32, %c128_i32 : i32
    %14 = vector.broadcast %13 : i32 to vector<128x512xi32>
    %15 = arith.remsi %11, %14 : vector<128x512xi32>
    %c0_i32_7 = arith.constant 0 : i32
    %16 = vector.broadcast %c0_i32_7 : i32 to vector<128x512xi32>
    %17 = arith.cmpi ne, %15, %16 : vector<128x512xi32>
    %c0_i32_8 = arith.constant 0 : i32
    %18 = vector.broadcast %c0_i32_8 : i32 to vector<128x512xi32>
    %19 = arith.cmpi slt, %15, %18 : vector<128x512xi32>
    %c0_i32_9 = arith.constant 0 : i32
    %20 = arith.cmpi slt, %13, %c0_i32_9 : i32
    %21 = vector.broadcast %20 : i1 to vector<128x512xi1>
    %22 = vector.broadcast %21 : vector<128x512xi1> to vector<128x512xi1>
    %23 = arith.xori %19, %22 : vector<128x512xi1>
    %24 = arith.andi %23, %17 : vector<128x512xi1>
    %25 = vector.broadcast %13 : i32 to vector<128x512xi32>
    %26 = arith.addi %15, %25 : vector<128x512xi32>
    %27 = arith.select %24, %26, %15 : vector<128x512xi1>, vector<128x512xi32>
    %c64_i32 = arith.constant 64 : i32
    %28 = vector.broadcast %c64_i32 : i32 to vector<128x512xi32>
    %29 = arith.cmpi slt, %27, %28 : vector<128x512xi32>
    %30 = arith.select %29, %7, %10 : vector<128x512xi1>, vector<128x512xf32>
    %31 = arith.mulf %4, %1 : vector<128x512xf32>
    %32 = arith.mulf %30, %2 : vector<128x512xf32>
    %33 = arith.addf %31, %32 : vector<128x512xf32>
    %34 = arith.truncf %33 : vector<128x512xf32> to vector<128x512xbf16>
    %c0_10 = arith.constant 0 : index
    %c0_11 = arith.constant 0 : index
    %35 = vector.load %arg7[%c0_10, %c0_11] : memref<128x512xbf16, #tpu.memory_space<vmem>>, vector<128x512xbf16>
    tpu.vector_store %arg7[%c0_10, %c0_11], %34 {strides = array<i32>} : memref<128x512xbf16, #tpu.memory_space<vmem>>, vector<128x512xbf16>,
    %c0_12 = arith.constant 0 : index
    %c0_13 = arith.constant 0 : index
    %36 = vector.load %arg3[%c0_12, %c0_13] : memref<128x256xbf16, #tpu.memory_space<vmem>>, vector<128x256xbf16>
    %cst_14 = arith.constant dense<0.000000e+00> : vector<128x256xf32>
    %37 = tpu.matmul %0, %36, %cst_14 {dimension_numbers = #tpu.dot_dimension_numbers<[1], [0], [0], [1], [0, 0, 1, 1], [], []>} : vector<128x128xbf16>, vector<128x256xbf16>, vector<128x256xf32> -> vector<128x256xf32>
    %38 = vector.extract_strided_slice %1 {offsets = [0, 0], sizes = [128, 256], strides = [1, 1]} : vector<128x512xf32> to vector<128x256xf32>
    %39 = vector.extract_strided_slice %2 {offsets = [0, 0], sizes = [128, 256], strides = [1, 1]} : vector<128x512xf32> to vector<128x256xf32>
    %40 = vector.extract_strided_slice %37 {offsets = [0, 64], sizes = [128, 192], strides = [1, 1]} : vector<128x256xf32> to vector<128x192xf32>
    %41 = vector.extract_strided_slice %37 {offsets = [0, 0], sizes = [128, 64], strides = [1, 1]} : vector<128x256xf32> to vector<128x64xf32>
    %42 = tpu.concatenate %40, %41 in 1 : vector<128x192xf32>, vector<128x64xf32> -> vector<128x256xf32>
    %43 = vector.extract_strided_slice %37 {offsets = [0, 192], sizes = [128, 64], strides = [1, 1]} : vector<128x256xf32> to vector<128x64xf32>
    %44 = vector.extract_strided_slice %37 {offsets = [0, 0], sizes = [128, 192], strides = [1, 1]} : vector<128x256xf32> to vector<128x192xf32>
    %45 = tpu.concatenate %43, %44 in 1 : vector<128x64xf32>, vector<128x192xf32> -> vector<128x256xf32>
    %46 = tpu.iota {dimensions = array<i32: 1>} : vector<128x256xi32>
    %c128_i32_15 = arith.constant 128 : i32
    %c0_i32_16 = arith.constant 0 : i32
    %47 = arith.cmpi eq, %c128_i32_15, %c0_i32_16 : i32
    %c1_i32_17 = arith.constant 1 : i32
    %48 = arith.select %47, %c1_i32_17, %c128_i32_15 : i32
    %49 = vector.broadcast %48 : i32 to vector<128x256xi32>
    %50 = arith.remsi %46, %49 : vector<128x256xi32>
    %c0_i32_18 = arith.constant 0 : i32
    %51 = vector.broadcast %c0_i32_18 : i32 to vector<128x256xi32>
    %52 = arith.cmpi ne, %50, %51 : vector<128x256xi32>
    %c0_i32_19 = arith.constant 0 : i32
    %53 = vector.broadcast %c0_i32_19 : i32 to vector<128x256xi32>
    %54 = arith.cmpi slt, %50, %53 : vector<128x256xi32>
    %c0_i32_20 = arith.constant 0 : i32
    %55 = arith.cmpi slt, %48, %c0_i32_20 : i32
    %56 = vector.broadcast %55 : i1 to vector<128x256xi1>
    %57 = vector.broadcast %56 : vector<128x256xi1> to vector<128x256xi1>
    %58 = arith.xori %54, %57 : vector<128x256xi1>
    %59 = arith.andi %58, %52 : vector<128x256xi1>
    %60 = vector.broadcast %48 : i32 to vector<128x256xi32>
    %61 = arith.addi %50, %60 : vector<128x256xi32>
    %62 = arith.select %59, %61, %50 : vector<128x256xi1>, vector<128x256xi32>
    %c64_i32_21 = arith.constant 64 : i32
    %63 = vector.broadcast %c64_i32_21 : i32 to vector<128x256xi32>
    %64 = arith.cmpi slt, %62, %63 : vector<128x256xi32>
    %65 = arith.select %64, %42, %45 : vector<128x256xi1>, vector<128x256xf32>
    %66 = arith.mulf %37, %38 : vector<128x256xf32>
    %67 = arith.mulf %65, %39 : vector<128x256xf32>
    %68 = arith.addf %66, %67 : vector<128x256xf32>
    %69 = arith.truncf %68 : vector<128x256xf32> to vector<128x256xbf16>
    %c0_22 = arith.constant 0 : index
    %c0_23 = arith.constant 0 : index
    %70 = vector.load %arg8[%c0_22, %c0_23] : memref<128x256xbf16, #tpu.memory_space<vmem>>, vector<128x256xbf16>
    tpu.vector_store %arg8[%c0_22, %c0_23], %69 {strides = array<i32>} : memref<128x256xbf16, #tpu.memory_space<vmem>>, vector<128x256xbf16>,
    %c0_24 = arith.constant 0 : index
    %c0_25 = arith.constant 0 : index
    %71 = vector.load %arg4[%c0_24, %c0_25] : memref<128x256xbf16, #tpu.memory_space<vmem>>, vector<128x256xbf16>
    %cst_26 = arith.constant dense<0.000000e+00> : vector<128x256xf32>
    %72 = tpu.matmul %0, %71, %cst_26 {dimension_numbers = #tpu.dot_dimension_numbers<[1], [0], [0], [1], [0, 0, 1, 1], [], []>} : vector<128x128xbf16>, vector<128x256xbf16>, vector<128x256xf32> -> vector<128x256xf32>
    %73 = arith.truncf %72 : vector<128x256xf32> to vector<128x256xbf16>
    %c0_27 = arith.constant 0 : index
    %c0_28 = arith.constant 0 : index
    %74 = vector.load %arg9[%c0_27, %c0_28] : memref<128x256xbf16, #tpu.memory_space<vmem>>, vector<128x256xbf16>
    tpu.vector_store %arg9[%c0_27, %c0_28], %73 {strides = array<i32>} : memref<128x256xbf16, #tpu.memory_space<vmem>>, vector<128x256xbf16>,
    return
  }
  func.func @transform_0(%arg0: i32) -> (i32, i32) {
    %c0_i32 = arith.constant 0 : i32
    %c0_i32_0 = arith.constant 0 : i32
    return %arg0, %c0_i32 : i32, i32
  }
  func.func @transform_1(%arg0: i32) -> (i32, i32) {
    %c0_i32 = arith.constant 0 : i32
    %c0_i32_0 = arith.constant 0 : i32
    %c0_i32_1 = arith.constant 0 : i32
    return %c0_i32, %c0_i32_0 : i32, i32
  }
  func.func @transform_2(%arg0: i32) -> (i32, i32) {
    %c0_i32 = arith.constant 0 : i32
    %c0_i32_0 = arith.constant 0 : i32
    %c0_i32_1 = arith.constant 0 : i32
    return %c0_i32, %c0_i32_0 : i32, i32
  }
  func.func @transform_3(%arg0: i32) -> (i32, i32) {
    %c0_i32 = arith.constant 0 : i32
    %c0_i32_0 = arith.constant 0 : i32
    %c0_i32_1 = arith.constant 0 : i32
    return %c0_i32, %c0_i32_0 : i32, i32
  }
  func.func @transform_4(%arg0: i32) -> (i32, i32) {
    %c0_i32 = arith.constant 0 : i32
    %c0_i32_0 = arith.constant 0 : i32
    return %arg0, %c0_i32 : i32, i32
  }
  func.func @transform_5(%arg0: i32) -> (i32, i32) {
    %c0_i32 = arith.constant 0 : i32
    %c0_i32_0 = arith.constant 0 : i32
    return %arg0, %c0_i32 : i32, i32
  }
  func.func @transform_6(%arg0: i32) -> (i32, i32) {
    %c0_i32 = arith.constant 0 : i32
    %c0_i32_0 = arith.constant 0 : i32
    return %arg0, %c0_i32 : i32, i32
  }
  func.func @transform_7(%arg0: i32) -> (i32, i32) {
    %c0_i32 = arith.constant 0 : i32
    %c0_i32_0 = arith.constant 0 : i32
    return %arg0, %c0_i32 : i32, i32
  }
  func.func @transform_8(%arg0: i32) -> (i32, i32) {
    %c0_i32 = arith.constant 0 : i32
    %c0_i32_0 = arith.constant 0 : i32
    return %arg0, %c0_i32 : i32, i32
  }
}

</mosaic_0001>

<llo_original>
// kernel: tpu_custom_call.1
$region0: #{tpu_custom_call.1}
  #allocation0 [shape = 'u32[]', space=smem, size = 0x4, offset = 0x4, fixed_abs, tag = 'smem constant byte address 0x4 - core index']
  #allocation1 [shape = 'u32[144,128]{1,0:T(1,128)}', space=vmem, size = 0x12000, scoped, tag = 'internal scratch']
  %s0 = inlined_call_operand.hbm [shape: bf16[128,128], index: 0, kind: input, shape index: {}]
  %s1 = inlined_call_operand.hbm [shape: bf16[128,512], index: 1, kind: input, shape index: {}]
  %s2 = inlined_call_operand.hbm [shape: bf16[128,256], index: 2, kind: input, shape index: {}]
  %s3 = inlined_call_operand.hbm [shape: bf16[128,256], index: 3, kind: input, shape index: {}]
  %s4 = inlined_call_operand.hbm [shape: f32[128,512], index: 4, kind: input, shape index: {}]
  %s5 = inlined_call_operand.hbm [shape: f32[128,512], index: 5, kind: input, shape index: {}]
  %s6 = inlined_call_operand.hbm [shape: bf16[128,512], index: 6, kind: output, shape index: {0}]
  %s7 = inlined_call_operand.hbm [shape: bf16[128,256], index: 7, kind: output, shape index: {1}]
  %s8 = inlined_call_operand.hbm [shape: bf16[128,256], index: 8, kind: output, shape index: {2}]
  %9 = xla_tuple %s6, %s7, %s8
  %s10 = sld [smem:[#allocation0]]
  $region74: #{tpu_custom_call.1} parent=0
    _
  %s12 = ssub.s32 1, %s10
  %s13 = scalar_select 0, %s12, %s10
  $region1: #{tpu_custom_call.1} parent=0
    #allocation2 [shape = 'u8[32768]{0}', space=vmem, size = 0x8000, scoped, tag = 'input window, operand 0, single buffered']
    #allocation3 [shape = 's32[1]{0}', space=sflag, size = 0x4, scoped, tag = 'scoped memory for tpu_custom_call.1']
    #allocation4 [shape = 's32[1]{0}', space=sflag, size = 0x4, scoped, tag = 'scoped memory for tpu_custom_call.1']
    #allocation5 [shape = 'u8[131072]{0}', space=vmem, size = 0x20000, scoped, tag = 'input window, operand 1, single buffered']
    #allocation6 [shape = 's32[1]{0}', space=sflag, size = 0x4, scoped, tag = 'scoped memory for tpu_custom_call.1']
    #allocation7 [shape = 'u8[65536]{0}', space=vmem, size = 0x10000, scoped, tag = 'input window, operand 2, single buffered']
    #allocation8 [shape = 'u8[65536]{0}', space=vmem, size = 0x10000, scoped, tag = 'input window, operand 3, single buffered']
    #allocation9 [shape = 's32[1]{0}', space=sflag, size = 0x4, scoped, tag = 'scoped memory for tpu_custom_call.1']
    #allocation10 [shape = 'u8[262144]{0}', space=vmem, size = 0x40000, scoped, tag = 'input window, operand 4, single buffered']
    #allocation11 [shape = 'u8[262144]{0}', space=vmem, size = 0x40000, scoped, tag = 'input window, operand 5, single buffered']
    #allocation12 [shape = 's32[1]{0}', space=sflag, size = 0x4, scoped, tag = 'scoped memory for tpu_custom_call.1']
    #allocation13 [shape = 'u8[131072]{0}', space=vmem, size = 0x20000, scoped, tag = 'output window, operand 0, single buffered']
    #allocation14 [shape = 'u8[65536]{0}', space=vmem, size = 0x10000, scoped, tag = 'output window, operand 1, single buffered']
    #allocation15 [shape = 's32[1]{0}', space=sflag, size = 0x4, scoped, tag = 'scoped memory for tpu_custom_call.1']
    #allocation16 [shape = 'u8[65536]{0}', space=vmem, size = 0x10000, scoped, tag = 'output window, operand 2, single buffered']
    %14 = vsyncpa [#allocation3], 0
    %15 = vsyncpa [#allocation6], 0
    %16 = vsyncpa [#allocation9], 0
    %17 = vsyncpa [#allocation12], 0
    %18 = vsyncpa [#allocation4], 0
    %19 = vsyncpa [#allocation15], 0
    // Predicated region
    $region2: #{tpu_custom_call.1} parent=1 // pred_check
      _
    $region3: #{tpu_custom_call.1} parent=1 // pred_check_branch
      %21 = sbr.rel (0) target = $region5
    $region4: #{tpu_custom_call.1} parent=1 // pred_region
      %s23 = ssub.s32 1024, 1024
      %24 = vsyncadd [#allocation3], %s23
      %s25 = sshll.u32 [#allocation2], 4
      %s26 = int_to_ptr.vmem [resolvable:$true] %s25
      %31 = dma.hbm_to_vmem [thread:$0]  %s0, 1024, %s26, [#allocation3], 64, 64, 4
    $region5: #{tpu_custom_call.1} parent=1 // pred_fallthru
      _
    // Predicated region
    $region6: #{tpu_custom_call.1} parent=1 // pred_check
      _
    $region7: #{tpu_custom_call.1} parent=1 // pred_check_branch
      %33 = sbr.rel (0) target = $region9
    $region8: #{tpu_custom_call.1} parent=1 // pred_region
      %s35 = ssub.s32 4096, 4096
      %36 = vsyncadd [#allocation6], %s35
      %s37 = sshll.u32 [#allocation5], 4
      %s38 = int_to_ptr.vmem [resolvable:$true] %s37
      %43 = dma.hbm_to_vmem [thread:$0]  %s1, 4096, %s38, [#allocation6], 256, 256, 16
    $region9: #{tpu_custom_call.1} parent=1 // pred_fallthru
      _
    // Predicated region
    $region10: #{tpu_custom_call.1} parent=1 // pred_check
      _
    $region11: #{tpu_custom_call.1} parent=1 // pred_check_branch
      %45 = sbr.rel (0) target = $region13
    $region12: #{tpu_custom_call.1} parent=1 // pred_region
      %s47 = ssub.s32 2048, 2048
      %48 = vsyncadd [#allocation6], %s47
      %s49 = sshll.u32 [#allocation7], 4
      %s50 = int_to_ptr.vmem [resolvable:$true] %s49
      %55 = dma.hbm_to_vmem [thread:$0]  %s2, 2048, %s50, [#allocation6], 128, 128, 8
    $region13: #{tpu_custom_call.1} parent=1 // pred_fallthru
      _
    // Predicated region
    $region14: #{tpu_custom_call.1} parent=1 // pred_check
      _
    $region15: #{tpu_custom_call.1} parent=1 // pred_check_branch
      %57 = sbr.rel (0) target = $region17
    $region16: #{tpu_custom_call.1} parent=1 // pred_region
      %s59 = ssub.s32 2048, 2048
      %60 = vsyncadd [#allocation9], %s59
      %s61 = sshll.u32 [#allocation8], 4
      %s62 = int_to_ptr.vmem [resolvable:$true] %s61
      %67 = dma.hbm_to_vmem [thread:$0]  %s3, 2048, %s62, [#allocation9], 128, 128, 8
    $region17: #{tpu_custom_call.1} parent=1 // pred_fallthru
      _
    // Predicated region
    $region18: #{tpu_custom_call.1} parent=1 // pred_check
      _
    $region19: #{tpu_custom_call.1} parent=1 // pred_check_branch
      %69 = sbr.rel (0) target = $region21
    $region20: #{tpu_custom_call.1} parent=1 // pred_region
      %s71 = ssub.s32 8192, 8192
      %72 = vsyncadd [#allocation9], %s71
      %s73 = sshll.u32 [#allocation10], 4
      %s74 = int_to_ptr.vmem [resolvable:$true] %s73
      %79 = dma.hbm_to_vmem [thread:$0]  %s4, 8192, %s74, [#allocation9], 512, 512, 32
    $region21: #{tpu_custom_call.1} parent=1 // pred_fallthru
      _
    // Predicated region
    $region22: #{tpu_custom_call.1} parent=1 // pred_check
      _
    $region23: #{tpu_custom_call.1} parent=1 // pred_check_branch
      %81 = sbr.rel (0) target = $region25
    $region24: #{tpu_custom_call.1} parent=1 // pred_region
      %s83 = ssub.s32 8192, 8192
      %84 = vsyncadd [#allocation12], %s83
      %s85 = sshll.u32 [#allocation11], 4
      %s86 = int_to_ptr.vmem [resolvable:$true] %s85
      %91 = dma.hbm_to_vmem [thread:$0]  %s5, 8192, %s86, [#allocation12], 512, 512, 32
    $region25: #{tpu_custom_call.1} parent=1 // pred_fallthru
      _
    // Predicated region
    $region26: #{tpu_custom_call.1} parent=1 // pred_check
      _
    $region27: #{tpu_custom_call.1} parent=1 // pred_check_branch
      %93 = sbr.rel (0) target = $region29
    $region28: #{tpu_custom_call.1} parent=1 // pred_region
      %94 = dma.done [#allocation3], 1024
    $region29: #{tpu_custom_call.1} parent=1 // pred_fallthru
      _
    // Predicated region
    $region30: #{tpu_custom_call.1} parent=1 // pred_check
      _
    $region31: #{tpu_custom_call.1} parent=1 // pred_check_branch
      %96 = sbr.rel (0) target = $region33
    $region32: #{tpu_custom_call.1} parent=1 // pred_region
      %97 = dma.done [#allocation6], 4096
    $region33: #{tpu_custom_call.1} parent=1 // pred_fallthru
      _
    // Predicated region
    $region34: #{tpu_custom_call.1} parent=1 // pred_check
      _
    $region35: #{tpu_custom_call.1} parent=1 // pred_check_branch
      %99 = sbr.rel (0) target = $region37
    $region36: #{tpu_custom_call.1} parent=1 // pred_region
      %100 = dma.done [#allocation6], 2048
    $region37: #{tpu_custom_call.1} parent=1 // pred_fallthru
      _
    // Predicated region
    $region38: #{tpu_custom_call.1} parent=1 // pred_check
      _
    $region39: #{tpu_custom_call.1} parent=1 // pred_check_branch
      %102 = sbr.rel (0) target = $region41
    $region40: #{tpu_custom_call.1} parent=1 // pred_region
      %103 = dma.done [#allocation9], 2048
    $region41: #{tpu_custom_call.1} parent=1 // pred_fallthru
      _
    // Predicated region
    $region42: #{tpu_custom_call.1} parent=1 // pred_check
      _
    $region43: #{tpu_custom_call.1} parent=1 // pred_check_branch
      %105 = sbr.rel (0) target = $region45
    $region44: #{tpu_custom_call.1} parent=1 // pred_region
      %106 = dma.done [#allocation9], 8192
    $region45: #{tpu_custom_call.1} parent=1 // pred_fallthru
      _
    // Predicated region
    $region46: #{tpu_custom_call.1} parent=1 // pred_check
      _
    $region47: #{tpu_custom_call.1} parent=1 // pred_check_branch
      %108 = sbr.rel (0) target = $region49
    $region48: #{tpu_custom_call.1} parent=1 // pred_region
      %109 = dma.done [#allocation12], 8192
    $region49: #{tpu_custom_call.1} parent=1 // pred_fallthru
      _
    %v111 = vld [vmem:[#allocation2] sm:$0xf]
    %v112 = vld [vmem:[#allocation2 + $0x4] sm:$0xf]
    %v113 = vld [vmem:[#allocation2 + $0x8] sm:$0xf]
    %v114 = vld [vmem:[#allocation2 + $0xc] sm:$0xf]
    %v115 = vld [vmem:[#allocation2 + $0x10] sm:$0xf]
    %v116 = vld [vmem:[#allocation2 + $0x14] sm:$0xf]
    %v117 = vld [vmem:[#allocation2 + $0x18] sm:$0xf]
    %v118 = vld [vmem:[#allocation2 + $0x1c] sm:$0xf]
    %v119 = vld [vmem:[#allocation2 + $0x20] sm:$0xf]
    %v120 = vld [vmem:[#allocation2 + $0x24] sm:$0xf]
    %v121 = vld [vmem:[#allocation2 + $0x28] sm:$0xf]
    %v122 = vld [vmem:[#allocation2 + $0x2c] sm:$0xf]
    %v123 = vld [vmem:[#allocation2 + $0x30] sm:$0xf]
    %v124 = vld [vmem:[#allocation2 + $0x34] sm:$0xf]
    %v125 = vld [vmem:[#allocation2 + $0x38] sm:$0xf]
    %v126 = vld [vmem:[#allocation2 + $0x3c] sm:$0xf]
    %v127 = vld [vmem:[#allocation10] sm:$0xff]
    %v128 = vld [vmem:[#allocation10 + $0x8] sm:$0xff]
    %v129 = vld [vmem:[#allocation10 + $0x10] sm:$0xff]
    %v130 = vld [vmem:[#allocation10 + $0x18] sm:$0xff]
    %v131 = vld [vmem:[#allocation10 + $0x20] sm:$0xff]
    %v132 = vld [vmem:[#allocation10 + $0x28] sm:$0xff]
    %v133 = vld [vmem:[#allocation10 + $0x30] sm:$0xff]
    %v134 = vld [vmem:[#allocation10 + $0x38] sm:$0xff]
    %v135 = vld [vmem:[#allocation10 + $0x40] sm:$0xff]
    %v136 = vld [vmem:[#allocation10 + $0x48] sm:$0xff]
    %v137 = vld [vmem:[#allocation10 + $0x50] sm:$0xff]
    %v138 = vld [vmem:[#allocation10 + $0x58] sm:$0xff]
    %v139 = vld [vmem:[#allocation10 + $0x60] sm:$0xff]
    %v140 = vld [vmem:[#allocation10 + $0x68] sm:$0xff]
    %v141 = vld [vmem:[#allocation10 + $0x70] sm:$0xff]
    %v142 = vld [vmem:[#allocation10 + $0x78] sm:$0xff]
    %v143 = vld [vmem:[#allocation10 + $0x80] sm:$0xff]
    %v144 = vld [vmem:[#allocation10 + $0x88] sm:$0xff]
    %v145 = vld [vmem:[#allocation10 + $0x90] sm:$0xff]
    %v146 = vld [vmem:[#allocation10 + $0x98] sm:$0xff]
    %v147 = vld [vmem:[#allocation10 + $0xa0] sm:$0xff]
    %v148 = vld [vmem:[#allocation10 + $0xa8] sm:$0xff]
    %v149 = vld [vmem:[#allocation10 + $0xb0] sm:$0xff]
    %v150 = vld [vmem:[#allocation10 + $0xb8] sm:$0xff]
    %v151 = vld [vmem:[#allocation10 + $0xc0] sm:$0xff]
    %v152 = vld [vmem:[#allocation10 + $0xc8] sm:$0xff]
    %v153 = vld [vmem:[#allocation10 + $0xd0] sm:$0xff]
    %v154 = vld [vmem:[#allocation10 + $0xd8] sm:$0xff]
    %v155 = vld [vmem:[#allocation10 + $0xe0] sm:$0xff]
    %v156 = vld [vmem:[#allocation10 + $0xe8] sm:$0xff]
    %v157 = vld [vmem:[#allocation10 + $0xf0] sm:$0xff]
    %v158 = vld [vmem:[#allocation10 + $0xf8] sm:$0xff]
    %v159 = vld [vmem:[#allocation10 + $0x100] sm:$0xff]
    %v160 = vld [vmem:[#allocation10 + $0x108] sm:$0xff]
    %v161 = vld [vmem:[#allocation10 + $0x110] sm:$0xff]
    %v162 = vld [vmem:[#allocation10 + $0x118] sm:$0xff]
    %v163 = vld [vmem:[#allocation10 + $0x120] sm:$0xff]
    %v164 = vld [vmem:[#allocation10 + $0x128] sm:$0xff]
    %v165 = vld [vmem:[#allocation10 + $0x130] sm:$0xff]
    %v166 = vld [vmem:[#allocation10 + $0x138] sm:$0xff]
    %v167 = vld [vmem:[#allocation10 + $0x140] sm:$0xff]
    %v168 = vld [vmem:[#allocation10 + $0x148] sm:$0xff]
    %v169 = vld [vmem:[#allocation10 + $0x150] sm:$0xff]
    %v170 = vld [vmem:[#allocation10 + $0x158] sm:$0xff]
    %v171 = vld [vmem:[#allocation10 + $0x160] sm:$0xff]
    %v172 = vld [vmem:[#allocation10 + $0x168] sm:$0xff]
    %v173 = vld [vmem:[#allocation10 + $0x170] sm:$0xff]
    %v174 = vld [vmem:[#allocation10 + $0x178] sm:$0xff]
    %v175 = vld [vmem:[#allocation10 + $0x180] sm:$0xff]
    %v176 = vld [vmem:[#allocation10 + $0x188] sm:$0xff]
    %v177 = vld [vmem:[#allocation10 + $0x190] sm:$0xff]
    %v178 = vld [vmem:[#allocation10 + $0x198] sm:$0xff]
    %v179 = vld [vmem:[#allocation10 + $0x1a0] sm:$0xff]
    %v180 = vld [vmem:[#allocation10 + $0x1a8] sm:$0xff]
    %v181 = vld [vmem:[#allocation10 + $0x1b0] sm:$0xff]
    %v182 = vld [vmem:[#allocation10 + $0x1b8] sm:$0xff]
    %v183 = vld [vmem:[#allocation10 + $0x1c0] sm:$0xff]
    %v184 = vld [vmem:[#allocation10 + $0x1c8] sm:$0xff]
    %v185 = vld [vmem:[#allocation10 + $0x1d0] sm:$0xff]
    %v186 = vld [vmem:[#allocation10 + $0x1d8] sm:$0xff]
    %v187 = vld [vmem:[#allocation10 + $0x1e0] sm:$0xff]
    %v188 = vld [vmem:[#allocation10 + $0x1e8] sm:$0xff]
    %v189 = vld [vmem:[#allocation10 + $0x1f0] sm:$0xff]
    %v190 = vld [vmem:[#allocation10 + $0x1f8] sm:$0xff]
    %v191 = vld [vmem:[#allocation11] sm:$0xff]
    %v192 = vld [vmem:[#allocation11 + $0x8] sm:$0xff]
    %v193 = vld [vmem:[#allocation11 + $0x10] sm:$0xff]
    %v194 = vld [vmem:[#allocation11 + $0x18] sm:$0xff]
    %v195 = vld [vmem:[#allocation11 + $0x20] sm:$0xff]
    %v196 = vld [vmem:[#allocation11 + $0x28] sm:$0xff]
    %v197 = vld [vmem:[#allocation11 + $0x30] sm:$0xff]
    %v198 = vld [vmem:[#allocation11 + $0x38] sm:$0xff]
    %v199 = vld [vmem:[#allocation11 + $0x40] sm:$0xff]
    %v200 = vld [vmem:[#allocation11 + $0x48] sm:$0xff]
    %v201 = vld [vmem:[#allocation11 + $0x50] sm:$0xff]
    %v202 = vld [vmem:[#allocation11 + $0x58] sm:$0xff]
    %v203 = vld [vmem:[#allocation11 + $0x60] sm:$0xff]
    %v204 = vld [vmem:[#allocation11 + $0x68] sm:$0xff]
    %v205 = vld [vmem:[#allocation11 + $0x70] sm:$0xff]
    %v206 = vld [vmem:[#allocation11 + $0x78] sm:$0xff]
    %v207 = vld [vmem:[#allocation11 + $0x80] sm:$0xff]
    %v208 = vld [vmem:[#allocation11 + $0x88] sm:$0xff]
    %v209 = vld [vmem:[#allocation11 + $0x90] sm:$0xff]
    %v210 = vld [vmem:[#allocation11 + $0x98] sm:$0xff]
    %v211 = vld [vmem:[#allocation11 + $0xa0] sm:$0xff]
    %v212 = vld [vmem:[#allocation11 + $0xa8] sm:$0xff]
    %v213 = vld [vmem:[#allocation11 + $0xb0] sm:$0xff]
    %v214 = vld [vmem:[#allocation11 + $0xb8] sm:$0xff]
    %v215 = vld [vmem:[#allocation11 + $0xc0] sm:$0xff]
    %v216 = vld [vmem:[#allocation11 + $0xc8] sm:$0xff]
    %v217 = vld [vmem:[#allocation11 + $0xd0] sm:$0xff]
    %v218 = vld [vmem:[#allocation11 + $0xd8] sm:$0xff]
    %v219 = vld [vmem:[#allocation11 + $0xe0] sm:$0xff]
    %v220 = vld [vmem:[#allocation11 + $0xe8] sm:$0xff]
    %v221 = vld [vmem:[#allocation11 + $0xf0] sm:$0xff]
    %v222 = vld [vmem:[#allocation11 + $0xf8] sm:$0xff]
    %v223 = vld [vmem:[#allocation11 + $0x100] sm:$0xff]
    %v224 = vld [vmem:[#allocation11 + $0x108] sm:$0xff]
    %v225 = vld [vmem:[#allocation11 + $0x110] sm:$0xff]
    %v226 = vld [vmem:[#allocation11 + $0x118] sm:$0xff]
    %v227 = vld [vmem:[#allocation11 + $0x120] sm:$0xff]
    %v228 = vld [vmem:[#allocation11 + $0x128] sm:$0xff]
    %v229 = vld [vmem:[#allocation11 + $0x130] sm:$0xff]
    %v230 = vld [vmem:[#allocation11 + $0x138] sm:$0xff]
    %v231 = vld [vmem:[#allocation11 + $0x140] sm:$0xff]
    %v232 = vld [vmem:[#allocation11 + $0x148] sm:$0xff]
    %v233 = vld [vmem:[#allocation11 + $0x150] sm:$0xff]
    %v234 = vld [vmem:[#allocation11 + $0x158] sm:$0xff]
    %v235 = vld [vmem:[#allocation11 + $0x160] sm:$0xff]
    %v236 = vld [vmem:[#allocation11 + $0x168] sm:$0xff]
    %v237 = vld [vmem:[#allocation11 + $0x170] sm:$0xff]
    %v238 = vld [vmem:[#allocation11 + $0x178] sm:$0xff]
    %v239 = vld [vmem:[#allocation11 + $0x180] sm:$0xff]
    %v240 = vld [vmem:[#allocation11 + $0x188] sm:$0xff]
    %v241 = vld [vmem:[#allocation11 + $0x190] sm:$0xff]
    %v242 = vld [vmem:[#allocation11 + $0x198] sm:$0xff]
    %v243 = vld [vmem:[#allocation11 + $0x1a0] sm:$0xff]
    %v244 = vld [vmem:[#allocation11 + $0x1a8] sm:$0xff]
    %v245 = vld [vmem:[#allocation11 + $0x1b0] sm:$0xff]
    %v246 = vld [vmem:[#allocation11 + $0x1b8] sm:$0xff]
    %v247 = vld [vmem:[#allocation11 + $0x1c0] sm:$0xff]
    %v248 = vld [vmem:[#allocation11 + $0x1c8] sm:$0xff]
    %v249 = vld [vmem:[#allocation11 + $0x1d0] sm:$0xff]
    %v250 = vld [vmem:[#allocation11 + $0x1d8] sm:$0xff]
    %v251 = vld [vmem:[#allocation11 + $0x1e0] sm:$0xff]
    %v252 = vld [vmem:[#allocation11 + $0x1e8] sm:$0xff]
    %v253 = vld [vmem:[#allocation11 + $0x1f0] sm:$0xff]
    %v254 = vld [vmem:[#allocation11 + $0x1f8] sm:$0xff]
    %v255 = vld [vmem:[#allocation5] sm:$0xff]
    %v256 = vld [vmem:[#allocation5 + $0x8] sm:$0xff]
    %v257 = vld [vmem:[#allocation5 + $0x10] sm:$0xff]
    %v258 = vld [vmem:[#allocation5 + $0x18] sm:$0xff]
    %v259 = vld [vmem:[#allocation5 + $0x20] sm:$0xff]
    %v260 = vld [vmem:[#allocation5 + $0x28] sm:$0xff]
    %v261 = vld [vmem:[#allocation5 + $0x30] sm:$0xff]
    %v262 = vld [vmem:[#allocation5 + $0x38] sm:$0xff]
    %v263 = vld [vmem:[#allocation5 + $0x40] sm:$0xff]
    %v264 = vld [vmem:[#allocation5 + $0x48] sm:$0xff]
    %v265 = vld [vmem:[#allocation5 + $0x50] sm:$0xff]
    %v266 = vld [vmem:[#allocation5 + $0x58] sm:$0xff]
    %v267 = vld [vmem:[#allocation5 + $0x60] sm:$0xff]
    %v268 = vld [vmem:[#allocation5 + $0x68] sm:$0xff]
    %v269 = vld [vmem:[#allocation5 + $0x70] sm:$0xff]
    %v270 = vld [vmem:[#allocation5 + $0x78] sm:$0xff]
    %v271 = vld [vmem:[#allocation5 + $0x80] sm:$0xff]
    %v272 = vld [vmem:[#allocation5 + $0x88] sm:$0xff]
    %v273 = vld [vmem:[#allocation5 + $0x90] sm:$0xff]
    %v274 = vld [vmem:[#allocation5 + $0x98] sm:$0xff]
    %v275 = vld [vmem:[#allocation5 + $0xa0] sm:$0xff]
    %v276 = vld [vmem:[#allocation5 + $0xa8] sm:$0xff]
    %v277 = vld [vmem:[#allocation5 + $0xb0] sm:$0xff]
    %v278 = vld [vmem:[#allocation5 + $0xb8] sm:$0xff]
    %v279 = vld [vmem:[#allocation5 + $0xc0] sm:$0xff]
    %v280 = vld [vmem:[#allocation5 + $0xc8] sm:$0xff]
    %v281 = vld [vmem:[#allocation5 + $0xd0] sm:$0xff]
    %v282 = vld [vmem:[#allocation5 + $0xd8] sm:$0xff]
    %v283 = vld [vmem:[#allocation5 + $0xe0] sm:$0xff]
    %v284 = vld [vmem:[#allocation5 + $0xe8] sm:$0xff]
    %v285 = vld [vmem:[#allocation5 + $0xf0] sm:$0xff]
    %v286 = vld [vmem:[#allocation5 + $0xf8] sm:$0xff]
    %v303 = vunpack.c.l.b16 %v111
    %v304 = vunpack.c.l.b16 %v112
    %v305 = vunpack.c.l.b16 %v113
    %v306 = vunpack.c.l.b16 %v114
    %v307 = vunpack.c.l.b16 %v115
    %v308 = vunpack.c.l.b16 %v116
    %v309 = vunpack.c.l.b16 %v117
    %v310 = vunpack.c.l.b16 %v118
    %v311 = vunpack.c.l.b16 %v119
    %v312 = vunpack.c.l.b16 %v120
    %v313 = vunpack.c.l.b16 %v121
    %v314 = vunpack.c.l.b16 %v122
    %v315 = vunpack.c.l.b16 %v123
    %v316 = vunpack.c.l.b16 %v124
    %v317 = vunpack.c.l.b16 %v125
    %v318 = vunpack.c.l.b16 %v126
    %v319 = vpack.c.b16 %v304, %v303
    %v320 = vpack.c.b16 %v306, %v305
    %v321 = vpack.c.b16 %v308, %v307
    %v322 = vpack.c.b16 %v310, %v309
    %v323 = vpack.c.b16 %v312, %v311
    %v324 = vpack.c.b16 %v314, %v313
    %v325 = vpack.c.b16 %v316, %v315
    %v326 = vpack.c.b16 %v318, %v317
    %v367 = vunpack.c.l.b16 %v255
    %v368 = vunpack.c.h.b16 %v255
    %v369 = vunpack.c.l.b16 %v256
    %v370 = vunpack.c.h.b16 %v256
    %v371 = vunpack.c.l.b16 %v257
    %v372 = vunpack.c.h.b16 %v257
    %v373 = vunpack.c.l.b16 %v258
    %v374 = vunpack.c.h.b16 %v258
    %v375 = vunpack.c.l.b16 %v259
    %v376 = vunpack.c.h.b16 %v259
    %v377 = vunpack.c.l.b16 %v260
    %v378 = vunpack.c.h.b16 %v260
    %v379 = vunpack.c.l.b16 %v261
    %v380 = vunpack.c.h.b16 %v261
    %v381 = vunpack.c.l.b16 %v262
    %v382 = vunpack.c.h.b16 %v262
    %v383 = vunpack.c.l.b16 %v263
    %v384 = vunpack.c.h.b16 %v263
    %v385 = vunpack.c.l.b16 %v264
    %v386 = vunpack.c.h.b16 %v264
    %v387 = vunpack.c.l.b16 %v265
    %v388 = vunpack.c.h.b16 %v265
    %v389 = vunpack.c.l.b16 %v266
    %v390 = vunpack.c.h.b16 %v266
    %v391 = vunpack.c.l.b16 %v267
    %v392 = vunpack.c.h.b16 %v267
    %v393 = vunpack.c.l.b16 %v268
    %v394 = vunpack.c.h.b16 %v268
    %v395 = vunpack.c.l.b16 %v269
    %v396 = vunpack.c.h.b16 %v269
    %v397 = vunpack.c.l.b16 %v270
    %v398 = vunpack.c.h.b16 %v270
    %v399 = vunpack.c.l.b16 %v271
    %v400 = vunpack.c.h.b16 %v271
    %v401 = vunpack.c.l.b16 %v272
    %v402 = vunpack.c.h.b16 %v272
    %v403 = vunpack.c.l.b16 %v273
    %v404 = vunpack.c.h.b16 %v273
    %v405 = vunpack.c.l.b16 %v274
    %v406 = vunpack.c.h.b16 %v274
    %v407 = vunpack.c.l.b16 %v275
    %v408 = vunpack.c.h.b16 %v275
    %v409 = vunpack.c.l.b16 %v276
    %v410 = vunpack.c.h.b16 %v276
    %v411 = vunpack.c.l.b16 %v277
    %v412 = vunpack.c.h.b16 %v277
    %v413 = vunpack.c.l.b16 %v278
    %v414 = vunpack.c.h.b16 %v278
    %v415 = vunpack.c.l.b16 %v279
    %v416 = vunpack.c.h.b16 %v279
    %v417 = vunpack.c.l.b16 %v280
    %v418 = vunpack.c.h.b16 %v280
    %v419 = vunpack.c.l.b16 %v281
    %v420 = vunpack.c.h.b16 %v281
    %v421 = vunpack.c.l.b16 %v282
    %v422 = vunpack.c.h.b16 %v282
    %v423 = vunpack.c.l.b16 %v283
    %v424 = vunpack.c.h.b16 %v283
    %v425 = vunpack.c.l.b16 %v284
    %v426 = vunpack.c.h.b16 %v284
    %v427 = vunpack.c.l.b16 %v285
    %v428 = vunpack.c.h.b16 %v285
    %v429 = vunpack.c.l.b16 %v286
    %v430 = vunpack.c.h.b16 %v286
    %v431 = vpack.c.b16 %v371, %v367
    %v432 = vpack.c.b16 %v372, %v368
    %v433 = vpack.c.b16 %v373, %v369
    %v434 = vpack.c.b16 %v374, %v370
    %v435 = vpack.c.b16 %v379, %v375
    %v436 = vpack.c.b16 %v380, %v376
    %v437 = vpack.c.b16 %v381, %v377
    %v438 = vpack.c.b16 %v382, %v378
    %v439 = vpack.c.b16 %v387, %v383
    %v440 = vpack.c.b16 %v388, %v384
    %v441 = vpack.c.b16 %v389, %v385
    %v442 = vpack.c.b16 %v390, %v386
    %v443 = vpack.c.b16 %v395, %v391
    %v444 = vpack.c.b16 %v396, %v392
    %v445 = vpack.c.b16 %v397, %v393
    %v446 = vpack.c.b16 %v398, %v394
    %v447 = vpack.c.b16 %v403, %v399
    %v448 = vpack.c.b16 %v404, %v400
    %v449 = vpack.c.b16 %v405, %v401
    %v450 = vpack.c.b16 %v406, %v402
    %v451 = vpack.c.b16 %v411, %v407
    %v452 = vpack.c.b16 %v412, %v408
    %v453 = vpack.c.b16 %v413, %v409
    %v454 = vpack.c.b16 %v414, %v410
    %v455 = vpack.c.b16 %v419, %v415
    %v456 = vpack.c.b16 %v420, %v416
    %v457 = vpack.c.b16 %v421, %v417
    %v458 = vpack.c.b16 %v422, %v418
    %v459 = vpack.c.b16 %v427, %v423
    %v460 = vpack.c.b16 %v428, %v424
    %v461 = vpack.c.b16 %v429, %v425
    %v462 = vpack.c.b16 %v430, %v426
    %495 = vmatprep.subr.bf16.mxu0 %v432
    %496 = vmatpush1.bf16.msra.mxu0 %v431
    %497 = vmatprep.subr.bf16.mxu0 %v436
    %498 = vmatpush1.bf16.msra.mxu0 %v435
    %499 = vmatprep.subr.bf16.mxu0 %v440
    %500 = vmatpush1.bf16.msra.mxu0 %v439
    %501 = vmatprep.subr.bf16.mxu0 %v444
    %502 = vmatpush1.bf16.msra.mxu0 %v443
    %503 = vmatprep.subr.bf16.mxu0 %v448
    %504 = vmatpush1.bf16.msra.mxu0 %v447
    %505 = vmatprep.subr.bf16.mxu0 %v452
    %506 = vmatpush1.bf16.msra.mxu0 %v451
    %507 = vmatprep.subr.bf16.mxu0 %v456
    %508 = vmatpush1.bf16.msra.mxu0 %v455
    %509 = vmatprep.subr.bf16.mxu0 %v460
    %510 = vmatpush1.bf16.msra.mxu0 %v459
    %511 = vmatprep.subr.bf16.mxu0 0
    %512 = vmatpush1.bf16.msra.mxu0 0
    %513 = vmatprep.subr.bf16.mxu0 0
    %514 = vmatpush1.bf16.msra.mxu0 0
    %515 = vmatprep.subr.bf16.mxu0 0
    %516 = vmatpush1.bf16.msra.mxu0 0
    %517 = vmatprep.subr.bf16.mxu0 0
    %518 = vmatpush1.bf16.msra.mxu0 0
    %519 = vmatprep.subr.bf16.mxu0 0
    %520 = vmatpush1.bf16.msra.mxu0 0
    %521 = vmatprep.subr.bf16.mxu0 0
    %522 = vmatpush1.bf16.msra.mxu0 0
    %523 = vmatprep.subr.bf16.mxu0 0
    %524 = vmatpush1.bf16.msra.mxu0 0
    %525 = vmatprep.subr.bf16.mxu0 0
    %526 = vmatpush1.bf16.msra.mxu0 0
    %527 = vmatprep.mubr.bf16.mxu0 0
    %528 = vmatmul.mubr.bf16.gmra.mrb[0].mxu0 %v319
    %v529 = vpop.f32.mrb[0].mxu0
    %v530 = vadd.f32 0.0, %v529
    %v531 = vpop.f32.mrb[0].mxu0
    %v532 = vadd.f32 0.0, %v531
    %v533 = vpop.f32.mrb[0].mxu0
    %v534 = vadd.f32 0.0, %v533
    %v535 = vpop.f32.mrb[0].mxu0
    %v536 = vadd.f32 0.0, %v535
    %537 = vmatprep.mubr.bf16.mxu0 0
    %538 = vmatmul.mubr.bf16.gmra.mrb[0].mxu0 %v320
    %v539 = vpop.f32.mrb[0].mxu0
    %v540 = vadd.f32 0.0, %v539
    %v541 = vpop.f32.mrb[0].mxu0
    %v542 = vadd.f32 0.0, %v541
    %v543 = vpop.f32.mrb[0].mxu0
    %v544 = vadd.f32 0.0, %v543
    %v545 = vpop.f32.mrb[0].mxu0
    %v546 = vadd.f32 0.0, %v545
    %547 = vmatprep.mubr.bf16.mxu0 0
    %548 = vmatmul.mubr.bf16.gmra.mrb[0].mxu0 %v321
    %v549 = vpop.f32.mrb[0].mxu0
    %v550 = vadd.f32 0.0, %v549
    %v551 = vpop.f32.mrb[0].mxu0
    %v552 = vadd.f32 0.0, %v551
    %v553 = vpop.f32.mrb[0].mxu0
    %v554 = vadd.f32 0.0, %v553
    %v555 = vpop.f32.mrb[0].mxu0
    %v556 = vadd.f32 0.0, %v555
    %557 = vmatprep.mubr.bf16.mxu0 0
    %558 = vmatmul.mubr.bf16.gmra.mrb[0].mxu0 %v322
    %v559 = vpop.f32.mrb[0].mxu0
    %v560 = vadd.f32 0.0, %v559
    %v561 = vpop.f32.mrb[0].mxu0
    %v562 = vadd.f32 0.0, %v561
    %v563 = vpop.f32.mrb[0].mxu0
    %v564 = vadd.f32 0.0, %v563
    %v565 = vpop.f32.mrb[0].mxu0
    %v566 = vadd.f32 0.0, %v565
    %567 = vmatprep.mubr.bf16.mxu0 0
    %568 = vmatmul.mubr.bf16.gmra.mrb[0].mxu0 %v323
    %v569 = vpop.f32.mrb[0].mxu0
    %v570 = vadd.f32 0.0, %v569
    %v571 = vpop.f32.mrb[0].mxu0
    %v572 = vadd.f32 0.0, %v571
    %v573 = vpop.f32.mrb[0].mxu0
    %v574 = vadd.f32 0.0, %v573
    %v575 = vpop.f32.mrb[0].mxu0
    %v576 = vadd.f32 0.0, %v575
    %577 = vmatprep.mubr.bf16.mxu0 0
    %578 = vmatmul.mubr.bf16.gmra.mrb[0].mxu0 %v324
    %v579 = vpop.f32.mrb[0].mxu0
    %v580 = vadd.f32 0.0, %v579
    %v581 = vpop.f32.mrb[0].mxu0
    %v582 = vadd.f32 0.0, %v581
    %v583 = vpop.f32.mrb[0].mxu0
    %v584 = vadd.f32 0.0, %v583
    %v585 = vpop.f32.mrb[0].mxu0
    %v586 = vadd.f32 0.0, %v585
    %587 = vmatprep.mubr.bf16.mxu0 0
    %588 = vmatmul.mubr.bf16.gmra.mrb[0].mxu0 %v325
    %v589 = vpop.f32.mrb[0].mxu0
    %v590 = vadd.f32 0.0, %v589
    %v591 = vpop.f32.mrb[0].mxu0
    %v592 = vadd.f32 0.0, %v591
    %v593 = vpop.f32.mrb[0].mxu0
    %v594 = vadd.f32 0.0, %v593
    %v595 = vpop.f32.mrb[0].mxu0
    %v596 = vadd.f32 0.0, %v595
    %597 = vmatprep.mubr.bf16.mxu0 0
    %598 = vmatmul.mubr.bf16.gmra.mrb[0].mxu0 %v326
    %v599 = vpop.f32.mrb[0].mxu0
    %v600 = vadd.f32 0.0, %v599
    %v601 = vpop.f32.mrb[0].mxu0
    %v602 = vadd.f32 0.0, %v601
    %v603 = vpop.f32.mrb[0].mxu0
    %v604 = vadd.f32 0.0, %v603
    %v605 = vpop.f32.mrb[0].mxu0
    %v606 = vadd.f32 0.0, %v605
    %607 = vdwg.mxu0
    %608 = vmatprep.subr.bf16.mxu0 %v434
    %609 = vmatpush1.bf16.msra.mxu0 %v433
    %610 = vmatprep.subr.bf16.mxu0 %v438
    %611 = vmatpush1.bf16.msra.mxu0 %v437
    %612 = vmatprep.subr.bf16.mxu0 %v442
    %613 = vmatpush1.bf16.msra.mxu0 %v441
    %614 = vmatprep.subr.bf16.mxu0 %v446
    %615 = vmatpush1.bf16.msra.mxu0 %v445
    %616 = vmatprep.subr.bf16.mxu0 %v450
    %617 = vmatpush1.bf16.msra.mxu0 %v449
    %618 = vmatprep.subr.bf16.mxu0 %v454
    %619 = vmatpush1.bf16.msra.mxu0 %v453
    %620 = vmatprep.subr.bf16.mxu0 %v458
    %621 = vmatpush1.bf16.msra.mxu0 %v457
    %622 = vmatprep.subr.bf16.mxu0 %v462
    %623 = vmatpush1.bf16.msra.mxu0 %v461
    %624 = vmatprep.subr.bf16.mxu0 0
    %625 = vmatpush1.bf16.msra.mxu0 0
    %626 = vmatprep.subr.bf16.mxu0 0
    %627 = vmatpush1.bf16.msra.mxu0 0
    %628 = vmatprep.subr.bf16.mxu0 0
    %629 = vmatpush1.bf16.msra.mxu0 0
    %630 = vmatprep.subr.bf16.mxu0 0
    %631 = vmatpush1.bf16.msra.mxu0 0
    %632 = vmatprep.subr.bf16.mxu0 0
    %633 = vmatpush1.bf16.msra.mxu0 0
    %634 = vmatprep.subr.bf16.mxu0 0
    %635 = vmatpush1.bf16.msra.mxu0 0
    %636 = vmatprep.subr.bf16.mxu0 0
    %637 = vmatpush1.bf16.msra.mxu0 0
    %638 = vmatprep.subr.bf16.mxu0 0
    %639 = vmatpush1.bf16.msra.mxu0 0
    %640 = vmatprep.mubr.bf16.mxu0 0
    %641 = vmatmul.mubr.bf16.gmra.mrb[0].mxu0 %v319
    %v642 = vpop.f32.mrb[0].mxu0
    %v643 = vadd.f32 0.0, %v642
    %v644 = vpop.f32.mrb[0].mxu0
    %v645 = vadd.f32 0.0, %v644
    %v646 = vpop.f32.mrb[0].mxu0
    %v647 = vadd.f32 0.0, %v646
    %v648 = vpop.f32.mrb[0].mxu0
    %v649 = vadd.f32 0.0, %v648
    %650 = vmatprep.mubr.bf16.mxu0 0
    %651 = vmatmul.mubr.bf16.gmra.mrb[0].mxu0 %v320
    %v652 = vpop.f32.mrb[0].mxu0
    %v653 = vadd.f32 0.0, %v652
    %v654 = vpop.f32.mrb[0].mxu0
    %v655 = vadd.f32 0.0, %v654
    %v656 = vpop.f32.mrb[0].mxu0
    %v657 = vadd.f32 0.0, %v656
    %v658 = vpop.f32.mrb[0].mxu0
    %v659 = vadd.f32 0.0, %v658
    %660 = vmatprep.mubr.bf16.mxu0 0
    %661 = vmatmul.mubr.bf16.gmra.mrb[0].mxu0 %v321
    %v662 = vpop.f32.mrb[0].mxu0
    %v663 = vadd.f32 0.0, %v662
    %v664 = vpop.f32.mrb[0].mxu0
    %v665 = vadd.f32 0.0, %v664
    %v666 = vpop.f32.mrb[0].mxu0
    %v667 = vadd.f32 0.0, %v666
    %v668 = vpop.f32.mrb[0].mxu0
    %v669 = vadd.f32 0.0, %v668
    %670 = vmatprep.mubr.bf16.mxu0 0
    %671 = vmatmul.mubr.bf16.gmra.mrb[0].mxu0 %v322
    %v672 = vpop.f32.mrb[0].mxu0
    %v673 = vadd.f32 0.0, %v672
    %v674 = vpop.f32.mrb[0].mxu0
    %v675 = vadd.f32 0.0, %v674
    %v676 = vpop.f32.mrb[0].mxu0
    %v677 = vadd.f32 0.0, %v676
    %v678 = vpop.f32.mrb[0].mxu0
    %v679 = vadd.f32 0.0, %v678
    %680 = vmatprep.mubr.bf16.mxu0 0
    %681 = vmatmul.mubr.bf16.gmra.mrb[0].mxu0 %v323
    %v682 = vpop.f32.mrb[0].mxu0
    %v683 = vadd.f32 0.0, %v682
    %v684 = vpop.f32.mrb[0].mxu0
    %v685 = vadd.f32 0.0, %v684
    %v686 = vpop.f32.mrb[0].mxu0
    %v687 = vadd.f32 0.0, %v686
    %v688 = vpop.f32.mrb[0].mxu0
    %v689 = vadd.f32 0.0, %v688
    %690 = vmatprep.mubr.bf16.mxu0 0
    %691 = vmatmul.mubr.bf16.gmra.mrb[0].mxu0 %v324
    %v692 = vpop.f32.mrb[0].mxu0
    %v693 = vadd.f32 0.0, %v692
    %v694 = vpop.f32.mrb[0].mxu0
    %v695 = vadd.f32 0.0, %v694
    %v696 = vpop.f32.mrb[0].mxu0
    %v697 = vadd.f32 0.0, %v696
    %v698 = vpop.f32.mrb[0].mxu0
    %v699 = vadd.f32 0.0, %v698
    %700 = vmatprep.mubr.bf16.mxu0 0
    %701 = vmatmul.mubr.bf16.gmra.mrb[0].mxu0 %v325
    %v702 = vpop.f32.mrb[0].mxu0
    %v703 = vadd.f32 0.0, %v702
    %v704 = vpop.f32.mrb[0].mxu0
    %v705 = vadd.f32 0.0, %v704
    %v706 = vpop.f32.mrb[0].mxu0
    %v707 = vadd.f32 0.0, %v706
    %v708 = vpop.f32.mrb[0].mxu0
    %v709 = vadd.f32 0.0, %v708
    %710 = vmatprep.mubr.bf16.mxu0 0
    %711 = vmatmul.mubr.bf16.gmra.mrb[0].mxu0 %v326
    %v712 = vpop.f32.mrb[0].mxu0
    %v713 = vadd.f32 0.0, %v712
    %v714 = vpop.f32.mrb[0].mxu0
    %v715 = vadd.f32 0.0, %v714
    %v716 = vpop.f32.mrb[0].mxu0
    %v717 = vadd.f32 0.0, %v716
    %v718 = vpop.f32.mrb[0].mxu0
    %v719 = vadd.f32 0.0, %v718
    %720 = vdwg.mxu0
    %785 = vrot.lane.b32.xlu0 %v530, 64
    %v786 = vpop.permute.xlu0 %785
    %787 = vrot.lane.b32.xlu0 %v532, 64
    %v788 = vpop.permute.xlu0 %787
    %789 = vrot.lane.b32.xlu0 %v643, 64
    %v790 = vpop.permute.xlu0 %789
    %791 = vrot.lane.b32.xlu0 %v645, 64
    %v792 = vpop.permute.xlu0 %791
    %793 = vrot.lane.b32.xlu0 %v534, 64
    %v794 = vpop.permute.xlu0 %793
    %795 = vrot.lane.b32.xlu0 %v536, 64
    %v796 = vpop.permute.xlu0 %795
    %797 = vrot.lane.b32.xlu0 %v647, 64
    %v798 = vpop.permute.xlu0 %797
    %799 = vrot.lane.b32.xlu0 %v649, 64
    %v800 = vpop.permute.xlu0 %799
    %801 = vrot.lane.b32.xlu0 %v540, 64
    %v802 = vpop.permute.xlu0 %801
    %803 = vrot.lane.b32.xlu0 %v542, 64
    %v804 = vpop.permute.xlu0 %803
    %805 = vrot.lane.b32.xlu0 %v653, 64
    %v806 = vpop.permute.xlu0 %805
    %807 = vrot.lane.b32.xlu0 %v655, 64
    %v808 = vpop.permute.xlu0 %807
    %809 = vrot.lane.b32.xlu0 %v544, 64
    %v810 = vpop.permute.xlu0 %809
    %811 = vrot.lane.b32.xlu0 %v546, 64
    %v812 = vpop.permute.xlu0 %811
    %813 = vrot.lane.b32.xlu0 %v657, 64
    %v814 = vpop.permute.xlu0 %813
    %815 = vrot.lane.b32.xlu0 %v659, 64
    %v816 = vpop.permute.xlu0 %815
    %817 = vrot.lane.b32.xlu0 %v550, 64
    %v818 = vpop.permute.xlu0 %817
    %819 = vrot.lane.b32.xlu0 %v552, 64
    %v820 = vpop.permute.xlu0 %819
    %821 = vrot.lane.b32.xlu0 %v663, 64
    %v822 = vpop.permute.xlu0 %821
    %823 = vrot.lane.b32.xlu0 %v665, 64
    %v824 = vpop.permute.xlu0 %823
    %825 = vrot.lane.b32.xlu0 %v554, 64
    %v826 = vpop.permute.xlu0 %825
    %827 = vrot.lane.b32.xlu0 %v556, 64
    %v828 = vpop.permute.xlu0 %827
    %829 = vrot.lane.b32.xlu0 %v667, 64
    %v830 = vpop.permute.xlu0 %829
    %831 = vrot.lane.b32.xlu0 %v669, 64
    %v832 = vpop.permute.xlu0 %831
    %833 = vrot.lane.b32.xlu0 %v560, 64
    %v834 = vpop.permute.xlu0 %833
    %835 = vrot.lane.b32.xlu0 %v562, 64
    %v836 = vpop.permute.xlu0 %835
    %837 = vrot.lane.b32.xlu0 %v673, 64
    %v838 = vpop.permute.xlu0 %837
    %839 = vrot.lane.b32.xlu0 %v675, 64
    %v840 = vpop.permute.xlu0 %839
    %841 = vrot.lane.b32.xlu0 %v564, 64
    %v842 = vpop.permute.xlu0 %841
    %843 = vrot.lane.b32.xlu0 %v566, 64
    %v844 = vpop.permute.xlu0 %843
    %845 = vrot.lane.b32.xlu0 %v677, 64
    %v846 = vpop.permute.xlu0 %845
    %847 = vrot.lane.b32.xlu0 %v679, 64
    %v848 = vpop.permute.xlu0 %847
    %849 = vrot.lane.b32.xlu0 %v570, 64
    %v850 = vpop.permute.xlu0 %849
    %851 = vrot.lane.b32.xlu0 %v572, 64
    %v852 = vpop.permute.xlu0 %851
    %853 = vrot.lane.b32.xlu0 %v683, 64
    %v854 = vpop.permute.xlu0 %853
    %855 = vrot.lane.b32.xlu0 %v685, 64
    %v856 = vpop.permute.xlu0 %855
    %857 = vrot.lane.b32.xlu0 %v574, 64
    %v858 = vpop.permute.xlu0 %857
    %859 = vrot.lane.b32.xlu0 %v576, 64
    %v860 = vpop.permute.xlu0 %859
    %861 = vrot.lane.b32.xlu0 %v687, 64
    %v862 = vpop.permute.xlu0 %861
    %863 = vrot.lane.b32.xlu0 %v689, 64
    %v864 = vpop.permute.xlu0 %863
    %865 = vrot.lane.b32.xlu0 %v580, 64
    %v866 = vpop.permute.xlu0 %865
    %867 = vrot.lane.b32.xlu0 %v582, 64
    %v868 = vpop.permute.xlu0 %867
    %869 = vrot.lane.b32.xlu0 %v693, 64
    %v870 = vpop.permute.xlu0 %869
    %871 = vrot.lane.b32.xlu0 %v695, 64
    %v872 = vpop.permute.xlu0 %871
    %873 = vrot.lane.b32.xlu0 %v584, 64
    %v874 = vpop.permute.xlu0 %873
    %875 = vrot.lane.b32.xlu0 %v586, 64
    %v876 = vpop.permute.xlu0 %875
    %877 = vrot.lane.b32.xlu0 %v697, 64
    %v878 = vpop.permute.xlu0 %877
    %879 = vrot.lane.b32.xlu0 %v699, 64
    %v880 = vpop.permute.xlu0 %879
    %881 = vrot.lane.b32.xlu0 %v590, 64
    %v882 = vpop.permute.xlu0 %881
    %883 = vrot.lane.b32.xlu0 %v592, 64
    %v884 = vpop.permute.xlu0 %883
    %885 = vrot.lane.b32.xlu0 %v703, 64
    %v886 = vpop.permute.xlu0 %885
    %887 = vrot.lane.b32.xlu0 %v705, 64
    %v888 = vpop.permute.xlu0 %887
    %889 = vrot.lane.b32.xlu0 %v594, 64
    %v890 = vpop.permute.xlu0 %889
    %891 = vrot.lane.b32.xlu0 %v596, 64
    %v892 = vpop.permute.xlu0 %891
    %893 = vrot.lane.b32.xlu0 %v707, 64
    %v894 = vpop.permute.xlu0 %893
    %895 = vrot.lane.b32.xlu0 %v709, 64
    %v896 = vpop.permute.xlu0 %895
    %897 = vrot.lane.b32.xlu0 %v600, 64
    %v898 = vpop.permute.xlu0 %897
    %899 = vrot.lane.b32.xlu0 %v602, 64
    %v900 = vpop.permute.xlu0 %899
    %901 = vrot.lane.b32.xlu0 %v713, 64
    %v902 = vpop.permute.xlu0 %901
    %903 = vrot.lane.b32.xlu0 %v715, 64
    %v904 = vpop.permute.xlu0 %903
    %905 = vrot.lane.b32.xlu0 %v604, 64
    %v906 = vpop.permute.xlu0 %905
    %907 = vrot.lane.b32.xlu0 %v606, 64
    %v908 = vpop.permute.xlu0 %907
    %909 = vrot.lane.b32.xlu0 %v717, 64
    %v910 = vpop.permute.xlu0 %909
    %911 = vrot.lane.b32.xlu0 %v719, 64
    %v912 = vpop.permute.xlu0 %911
    %vm913 = vcmask 523264
    %v914 = vsel %vm913, %v786, %v788
    %v915 = vsel %vm913, %v788, %v790
    %v916 = vsel %vm913, %v790, %v792
    %v917 = vsel %vm913, %v794, %v796
    %v918 = vsel %vm913, %v796, %v798
    %v919 = vsel %vm913, %v798, %v800
    %v920 = vsel %vm913, %v802, %v804
    %v921 = vsel %vm913, %v804, %v806
    %v922 = vsel %vm913, %v806, %v808
    %v923 = vsel %vm913, %v810, %v812
    %v924 = vsel %vm913, %v812, %v814
    %v925 = vsel %vm913, %v814, %v816
    %v926 = vsel %vm913, %v818, %v820
    %v927 = vsel %vm913, %v820, %v822
    %v928 = vsel %vm913, %v822, %v824
    %v929 = vsel %vm913, %v826, %v828
    %v930 = vsel %vm913, %v828, %v830
    %v931 = vsel %vm913, %v830, %v832
    %v932 = vsel %vm913, %v834, %v836
    %v933 = vsel %vm913, %v836, %v838
    %v934 = vsel %vm913, %v838, %v840
    %v935 = vsel %vm913, %v842, %v844
    %v936 = vsel %vm913, %v844, %v846
    %v937 = vsel %vm913, %v846, %v848
    %v938 = vsel %vm913, %v850, %v852
    %v939 = vsel %vm913, %v852, %v854
    %v940 = vsel %vm913, %v854, %v856
    %v941 = vsel %vm913, %v858, %v860
    %v942 = vsel %vm913, %v860, %v862
    %v943 = vsel %vm913, %v862, %v864
    %v944 = vsel %vm913, %v866, %v868
    %v945 = vsel %vm913, %v868, %v870
    %v946 = vsel %vm913, %v870, %v872
    %v947 = vsel %vm913, %v874, %v876
    %v948 = vsel %vm913, %v876, %v878
    %v949 = vsel %vm913, %v878, %v880
    %v950 = vsel %vm913, %v882, %v884
    %v951 = vsel %vm913, %v884, %v886
    %v952 = vsel %vm913, %v886, %v888
    %v953 = vsel %vm913, %v890, %v892
    %v954 = vsel %vm913, %v892, %v894
    %v955 = vsel %vm913, %v894, %v896
    %v956 = vsel %vm913, %v898, %v900
    %v957 = vsel %vm913, %v900, %v902
    %v958 = vsel %vm913, %v902, %v904
    %v959 = vsel %vm913, %v906, %v908
    %v960 = vsel %vm913, %v908, %v910
    %v961 = vsel %vm913, %v910, %v912
    %v1042 = vsel %vm913, %v792, %v786
    %v1043 = vsel %vm913, %v800, %v794
    %v1044 = vsel %vm913, %v808, %v802
    %v1045 = vsel %vm913, %v816, %v810
    %v1046 = vsel %vm913, %v824, %v818
    %v1047 = vsel %vm913, %v832, %v826
    %v1048 = vsel %vm913, %v840, %v834
    %v1049 = vsel %vm913, %v848, %v842
    %v1050 = vsel %vm913, %v856, %v850
    %v1051 = vsel %vm913, %v864, %v858
    %v1052 = vsel %vm913, %v872, %v866
    %v1053 = vsel %vm913, %v880, %v874
    %v1054 = vsel %vm913, %v888, %v882
    %v1055 = vsel %vm913, %v896, %v890
    %v1056 = vsel %vm913, %v904, %v898
    %v1057 = vsel %vm913, %v912, %v906
    %v1058 = vlaneseq
    %v1059 = vand.u32 %v1058, 127
    %v1060 = vadd.s32 %v1059, 128
    %v1061 = vadd.s32 %v1059, 256
    %v1062 = vadd.s32 %v1059, 384
    %vm1063 = vcmp.lt.s32.totalorder %v1059, 0
    %v1064 = vsub.s32 0, %v1059
    %v1065 = vsel %vm1063, %v1064, %v1059
    %v1066 = vshrl.u32 %v1065, 7
    %v1067 = vand.u32 %v1065, 127
    %v1068 = vsub.s32 0, %v1067
    %v1069 = vsel %vm1063, %v1068, %v1067
    %vm1070 = vcmp.lt.s32.totalorder %v1060, 0
    %v1071 = vsub.s32 0, %v1060
    %v1072 = vsel %vm1070, %v1071, %v1060
    %v1073 = vshrl.u32 %v1072, 7
    %v1074 = vand.u32 %v1072, 127
    %v1075 = vsub.s32 0, %v1074
    %v1076 = vsel %vm1070, %v1075, %v1074
    %vm1077 = vcmp.lt.s32.totalorder %v1061, 0
    %v1078 = vsub.s32 0, %v1061
    %v1079 = vsel %vm1077, %v1078, %v1061
    %v1080 = vshrl.u32 %v1079, 7
    %v1081 = vand.u32 %v1079, 127
    %v1082 = vsub.s32 0, %v1081
    %v1083 = vsel %vm1077, %v1082, %v1081
    %vm1084 = vcmp.lt.s32.totalorder %v1062, 0
    %v1085 = vsub.s32 0, %v1062
    %v1086 = vsel %vm1084, %v1085, %v1062
    %v1087 = vshrl.u32 %v1086, 7
    %v1088 = vand.u32 %v1086, 127
    %v1089 = vsub.s32 0, %v1088
    %v1090 = vsel %vm1084, %v1089, %v1088
    %vm1091 = vcmp.ne.s32.totalorder %v1069, 0
    %vm1092 = vcmp.ne.s32.totalorder %v1076, 0
    %vm1093 = vcmp.ne.s32.totalorder %v1083, 0
    %vm1094 = vcmp.ne.s32.totalorder %v1090, 0
    %vm1095 = vcmp.lt.s32.totalorder %v1069, 0
    %vm1096 = vcmp.lt.s32.totalorder %v1076, 0
    %vm1097 = vcmp.lt.s32.totalorder %v1083, 0
    %vm1098 = vcmp.lt.s32.totalorder %v1090, 0
    %vm1099 = vmand %vm1095, %vm1091
    %vm1100 = vmand %vm1096, %vm1092
    %vm1101 = vmand %vm1097, %vm1093
    %vm1102 = vmand %vm1098, %vm1094
    %v1103 = vadd.s32 %v1069, 128
    %v1104 = vadd.s32 %v1076, 128
    %v1105 = vadd.s32 %v1083, 128
    %v1106 = vadd.s32 %v1090, 128
    %v1107 = vsel %vm1099, %v1103, %v1069
    %v1108 = vsel %vm1100, %v1104, %v1076
    %v1109 = vsel %vm1101, %v1105, %v1083
    %v1110 = vsel %vm1102, %v1106, %v1090
    %vm1111 = vcmp.lt.s32.totalorder %v1107, 64
    %vm1112 = vcmp.lt.s32.totalorder %v1108, 64
    %vm1113 = vcmp.lt.s32.totalorder %v1109, 64
    %vm1114 = vcmp.lt.s32.totalorder %v1110, 64
    %v1115 = vsel %vm1111, %v914, %v1042
    %v1116 = vsel %vm1112, %v915, %v914
    %v1117 = vsel %vm1113, %v916, %v915
    %v1118 = vsel %vm1114, %v1042, %v916
    %v1119 = vsel %vm1111, %v917, %v1043
    %v1120 = vsel %vm1112, %v918, %v917
    %v1121 = vsel %vm1113, %v919, %v918
    %v1122 = vsel %vm1114, %v1043, %v919
    %v1123 = vsel %vm1111, %v920, %v1044
    %v1124 = vsel %vm1112, %v921, %v920
    %v1125 = vsel %vm1113, %v922, %v921
    %v1126 = vsel %vm1114, %v1044, %v922
    %v1127 = vsel %vm1111, %v923, %v1045
    %v1128 = vsel %vm1112, %v924, %v923
    %v1129 = vsel %vm1113, %v925, %v924
    %v1130 = vsel %vm1114, %v1045, %v925
    %v1131 = vsel %vm1111, %v926, %v1046
    %v1132 = vsel %vm1112, %v927, %v926
    %v1133 = vsel %vm1113, %v928, %v927
    %v1134 = vsel %vm1114, %v1046, %v928
    %v1135 = vsel %vm1111, %v929, %v1047
    %v1136 = vsel %vm1112, %v930, %v929
    %v1137 = vsel %vm1113, %v931, %v930
    %v1138 = vsel %vm1114, %v1047, %v931
    %v1139 = vsel %vm1111, %v932, %v1048
    %v1140 = vsel %vm1112, %v933, %v932
    %v1141 = vsel %vm1113, %v934, %v933
    %v1142 = vsel %vm1114, %v1048, %v934
    %v1143 = vsel %vm1111, %v935, %v1049
    %v1144 = vsel %vm1112, %v936, %v935
    %v1145 = vsel %vm1113, %v937, %v936
    %v1146 = vsel %vm1114, %v1049, %v937
    %v1147 = vsel %vm1111, %v938, %v1050
    %v1148 = vsel %vm1112, %v939, %v938
    %v1149 = vsel %vm1113, %v940, %v939
    %v1150 = vsel %vm1114, %v1050, %v940
    %v1151 = vsel %vm1111, %v941, %v1051
    %v1152 = vsel %vm1112, %v942, %v941
    %v1153 = vsel %vm1113, %v943, %v942
    %v1154 = vsel %vm1114, %v1051, %v943
    %v1155 = vsel %vm1111, %v944, %v1052
    %v1156 = vsel %vm1112, %v945, %v944
    %v1157 = vsel %vm1113, %v946, %v945
    %v1158 = vsel %vm1114, %v1052, %v946
    %v1159 = vsel %vm1111, %v947, %v1053
    %v1160 = vsel %vm1112, %v948, %v947
    %v1161 = vsel %vm1113, %v949, %v948
    %v1162 = vsel %vm1114, %v1053, %v949
    %v1163 = vsel %vm1111, %v950, %v1054
    %v1164 = vsel %vm1112, %v951, %v950
    %v1165 = vsel %vm1113, %v952, %v951
    %v1166 = vsel %vm1114, %v1054, %v952
    %v1167 = vsel %vm1111, %v953, %v1055
    %v1168 = vsel %vm1112, %v954, %v953
    %v1169 = vsel %vm1113, %v955, %v954
    %v1170 = vsel %vm1114, %v1055, %v955
    %v1171 = vsel %vm1111, %v956, %v1056
    %v1172 = vsel %vm1112, %v957, %v956
    %v1173 = vsel %vm1113, %v958, %v957
    %v1174 = vsel %vm1114, %v1056, %v958
    %v1175 = vsel %vm1111, %v959, %v1057
    %v1176 = vsel %vm1112, %v960, %v959
    %v1177 = vsel %vm1113, %v961, %v960
    %v1178 = vsel %vm1114, %v1057, %v961
    %v1179 = vmul.f32 %v530, %v127
    %v1180 = vmul.f32 %v532, %v128
    %v1181 = vmul.f32 %v643, %v129
    %v1182 = vmul.f32 %v645, %v130
    %v1183 = vmul.f32 %v534, %v131
    %v1184 = vmul.f32 %v536, %v132
    %v1185 = vmul.f32 %v647, %v133
    %v1186 = vmul.f32 %v649, %v134
    %v1187 = vmul.f32 %v540, %v135
    %v1188 = vmul.f32 %v542, %v136
    %v1189 = vmul.f32 %v653, %v137
    %v1190 = vmul.f32 %v655, %v138
    %v1191 = vmul.f32 %v544, %v139
    %v1192 = vmul.f32 %v546, %v140
    %v1193 = vmul.f32 %v657, %v141
    %v1194 = vmul.f32 %v659, %v142
    %v1195 = vmul.f32 %v550, %v143
    %v1196 = vmul.f32 %v552, %v144
    %v1197 = vmul.f32 %v663, %v145
    %v1198 = vmul.f32 %v665, %v146
    %v1199 = vmul.f32 %v554, %v147
    %v1200 = vmul.f32 %v556, %v148
    %v1201 = vmul.f32 %v667, %v149
    %v1202 = vmul.f32 %v669, %v150
    %v1203 = vmul.f32 %v560, %v151
    %v1204 = vmul.f32 %v562, %v152
    %v1205 = vmul.f32 %v673, %v153
    %v1206 = vmul.f32 %v675, %v154
    %v1207 = vmul.f32 %v564, %v155
    %v1208 = vmul.f32 %v566, %v156
    %v1209 = vmul.f32 %v677, %v157
    %v1210 = vmul.f32 %v679, %v158
    %v1211 = vmul.f32 %v570, %v159
    %v1212 = vmul.f32 %v572, %v160
    %v1213 = vmul.f32 %v683, %v161
    %v1214 = vmul.f32 %v685, %v162
    %v1215 = vmul.f32 %v574, %v163
    %v1216 = vmul.f32 %v576, %v164
    %v1217 = vmul.f32 %v687, %v165
    %v1218 = vmul.f32 %v689, %v166
    %v1219 = vmul.f32 %v580, %v167
    %v1220 = vmul.f32 %v582, %v168
    %v1221 = vmul.f32 %v693, %v169
    %v1222 = vmul.f32 %v695, %v170
    %v1223 = vmul.f32 %v584, %v171
    %v1224 = vmul.f32 %v586, %v172
    %v1225 = vmul.f32 %v697, %v173
    %v1226 = vmul.f32 %v699, %v174
    %v1227 = vmul.f32 %v590, %v175
    %v1228 = vmul.f32 %v592, %v176
    %v1229 = vmul.f32 %v703, %v177
    %v1230 = vmul.f32 %v705, %v178
    %v1231 = vmul.f32 %v594, %v179
    %v1232 = vmul.f32 %v596, %v180
    %v1233 = vmul.f32 %v707, %v181
    %v1234 = vmul.f32 %v709, %v182
    %v1235 = vmul.f32 %v600, %v183
    %v1236 = vmul.f32 %v602, %v184
    %v1237 = vmul.f32 %v713, %v185
    %v1238 = vmul.f32 %v715, %v186
    %v1239 = vmul.f32 %v604, %v187
    %v1240 = vmul.f32 %v606, %v188
    %v1241 = vmul.f32 %v717, %v189
    %v1242 = vmul.f32 %v719, %v190
    %v1243 = vmul.f32 %v1115, %v191
    %v1244 = vmul.f32 %v1116, %v192
    %v1245 = vmul.f32 %v1117, %v193
    %v1246 = vmul.f32 %v1118, %v194
    %v1247 = vmul.f32 %v1119, %v195
    %v1248 = vmul.f32 %v1120, %v196
    %v1249 = vmul.f32 %v1121, %v197
    %v1250 = vmul.f32 %v1122, %v198
    %v1251 = vmul.f32 %v1123, %v199
    %v1252 = vmul.f32 %v1124, %v200
    %v1253 = vmul.f32 %v1125, %v201
    %v1254 = vmul.f32 %v1126, %v202
    %v1255 = vmul.f32 %v1127, %v203
    %v1256 = vmul.f32 %v1128, %v204
    %v1257 = vmul.f32 %v1129, %v205
    %v1258 = vmul.f32 %v1130, %v206
    %v1259 = vmul.f32 %v1131, %v207
    %v1260 = vmul.f32 %v1132, %v208
    %v1261 = vmul.f32 %v1133, %v209
    %v1262 = vmul.f32 %v1134, %v210
    %v1263 = vmul.f32 %v1135, %v211
    %v1264 = vmul.f32 %v1136, %v212
    %v1265 = vmul.f32 %v1137, %v213
    %v1266 = vmul.f32 %v1138, %v214
    %v1267 = vmul.f32 %v1139, %v215
    %v1268 = vmul.f32 %v1140, %v216
    %v1269 = vmul.f32 %v1141, %v217
    %v1270 = vmul.f32 %v1142, %v218
    %v1271 = vmul.f32 %v1143, %v219
    %v1272 = vmul.f32 %v1144, %v220
    %v1273 = vmul.f32 %v1145, %v221
    %v1274 = vmul.f32 %v1146, %v222
    %v1275 = vmul.f32 %v1147, %v223
    %v1276 = vmul.f32 %v1148, %v224
    %v1277 = vmul.f32 %v1149, %v225
    %v1278 = vmul.f32 %v1150, %v226
    %v1279 = vmul.f32 %v1151, %v227
    %v1280 = vmul.f32 %v1152, %v228
    %v1281 = vmul.f32 %v1153, %v229
    %v1282 = vmul.f32 %v1154, %v230
    %v1283 = vmul.f32 %v1155, %v231
    %v1284 = vmul.f32 %v1156, %v232
    %v1285 = vmul.f32 %v1157, %v233
    %v1286 = vmul.f32 %v1158, %v234
    %v1287 = vmul.f32 %v1159, %v235
    %v1288 = vmul.f32 %v1160, %v236
    %v1289 = vmul.f32 %v1161, %v237
    %v1290 = vmul.f32 %v1162, %v238
    %v1291 = vmul.f32 %v1163, %v239
    %v1292 = vmul.f32 %v1164, %v240
    %v1293 = vmul.f32 %v1165, %v241
    %v1294 = vmul.f32 %v1166, %v242
    %v1295 = vmul.f32 %v1167, %v243
    %v1296 = vmul.f32 %v1168, %v244
    %v1297 = vmul.f32 %v1169, %v245
    %v1298 = vmul.f32 %v1170, %v246
    %v1299 = vmul.f32 %v1171, %v247
    %v1300 = vmul.f32 %v1172, %v248
    %v1301 = vmul.f32 %v1173, %v249
    %v1302 = vmul.f32 %v1174, %v250
    %v1303 = vmul.f32 %v1175, %v251
    %v1304 = vmul.f32 %v1176, %v252
    %v1305 = vmul.f32 %v1177, %v253
    %v1306 = vmul.f32 %v1178, %v254
    %v1307 = vadd.f32 %v1179, %v1243
    %v1308 = vadd.f32 %v1180, %v1244
    %v1309 = vadd.f32 %v1181, %v1245
    %v1310 = vadd.f32 %v1182, %v1246
    %v1311 = vadd.f32 %v1183, %v1247
    %v1312 = vadd.f32 %v1184, %v1248
    %v1313 = vadd.f32 %v1185, %v1249
    %v1314 = vadd.f32 %v1186, %v1250
    %v1315 = vadd.f32 %v1187, %v1251
    %v1316 = vadd.f32 %v1188, %v1252
    %v1317 = vadd.f32 %v1189, %v1253
    %v1318 = vadd.f32 %v1190, %v1254
    %v1319 = vadd.f32 %v1191, %v1255
    %v1320 = vadd.f32 %v1192, %v1256
    %v1321 = vadd.f32 %v1193, %v1257
    %v1322 = vadd.f32 %v1194, %v1258
    %v1323 = vadd.f32 %v1195, %v1259
    %v1324 = vadd.f32 %v1196, %v1260
    %v1325 = vadd.f32 %v1197, %v1261
    %v1326 = vadd.f32 %v1198, %v1262
    %v1327 = vadd.f32 %v1199, %v1263
    %v1328 = vadd.f32 %v1200, %v1264
    %v1329 = vadd.f32 %v1201, %v1265
    %v1330 = vadd.f32 %v1202, %v1266
    %v1331 = vadd.f32 %v1203, %v1267
    %v1332 = vadd.f32 %v1204, %v1268
    %v1333 = vadd.f32 %v1205, %v1269
    %v1334 = vadd.f32 %v1206, %v1270
    %v1335 = vadd.f32 %v1207, %v1271
    %v1336 = vadd.f32 %v1208, %v1272
    %v1337 = vadd.f32 %v1209, %v1273
    %v1338 = vadd.f32 %v1210, %v1274
    %v1339 = vadd.f32 %v1211, %v1275
    %v1340 = vadd.f32 %v1212, %v1276
    %v1341 = vadd.f32 %v1213, %v1277
    %v1342 = vadd.f32 %v1214, %v1278
    %v1343 = vadd.f32 %v1215, %v1279
    %v1344 = vadd.f32 %v1216, %v1280
    %v1345 = vadd.f32 %v1217, %v1281
    %v1346 = vadd.f32 %v1218, %v1282
    %v1347 = vadd.f32 %v1219, %v1283
    %v1348 = vadd.f32 %v1220, %v1284
    %v1349 = vadd.f32 %v1221, %v1285
    %v1350 = vadd.f32 %v1222, %v1286
    %v1351 = vadd.f32 %v1223, %v1287
    %v1352 = vadd.f32 %v1224, %v1288
    %v1353 = vadd.f32 %v1225, %v1289
    %v1354 = vadd.f32 %v1226, %v1290
    %v1355 = vadd.f32 %v1227, %v1291
    %v1356 = vadd.f32 %v1228, %v1292
    %v1357 = vadd.f32 %v1229, %v1293
    %v1358 = vadd.f32 %v1230, %v1294
    %v1359 = vadd.f32 %v1231, %v1295
    %v1360 = vadd.f32 %v1232, %v1296
    %v1361 = vadd.f32 %v1233, %v1297
    %v1362 = vadd.f32 %v1234, %v1298
    %v1363 = vadd.f32 %v1235, %v1299
    %v1364 = vadd.f32 %v1236, %v1300
    %v1365 = vadd.f32 %v1237, %v1301
    %v1366 = vadd.f32 %v1238, %v1302
    %v1367 = vadd.f32 %v1239, %v1303
    %v1368 = vadd.f32 %v1240, %v1304
    %v1369 = vadd.f32 %v1241, %v1305
    %v1370 = vadd.f32 %v1242, %v1306
    %v1371 = vpack.c.bf16 %v1311, %v1307
    %v1372 = vpack.c.bf16 %v1312, %v1308
    %v1373 = vpack.c.bf16 %v1313, %v1309
    %v1374 = vpack.c.bf16 %v1314, %v1310
    %v1375 = vpack.c.bf16 %v1319, %v1315
    %v1376 = vpack.c.bf16 %v1320, %v1316
    %v1377 = vpack.c.bf16 %v1321, %v1317
    %v1378 = vpack.c.bf16 %v1322, %v1318
    %v1379 = vpack.c.bf16 %v1327, %v1323
    %v1380 = vpack.c.bf16 %v1328, %v1324
    %v1381 = vpack.c.bf16 %v1329, %v1325
    %v1382 = vpack.c.bf16 %v1330, %v1326
    %v1383 = vpack.c.bf16 %v1335, %v1331
    %v1384 = vpack.c.bf16 %v1336, %v1332
    %v1385 = vpack.c.bf16 %v1337, %v1333
    %v1386 = vpack.c.bf16 %v1338, %v1334
    %v1387 = vpack.c.bf16 %v1343, %v1339
    %v1388 = vpack.c.bf16 %v1344, %v1340
    %v1389 = vpack.c.bf16 %v1345, %v1341
    %v1390 = vpack.c.bf16 %v1346, %v1342
    %v1391 = vpack.c.bf16 %v1351, %v1347
    %v1392 = vpack.c.bf16 %v1352, %v1348
    %v1393 = vpack.c.bf16 %v1353, %v1349
    %v1394 = vpack.c.bf16 %v1354, %v1350
    %v1395 = vpack.c.bf16 %v1359, %v1355
    %v1396 = vpack.c.bf16 %v1360, %v1356
    %v1397 = vpack.c.bf16 %v1361, %v1357
    %v1398 = vpack.c.bf16 %v1362, %v1358
    %v1399 = vpack.c.bf16 %v1367, %v1363
    %v1400 = vpack.c.bf16 %v1368, %v1364
    %v1401 = vpack.c.bf16 %v1369, %v1365
    %v1402 = vpack.c.bf16 %v1370, %v1366
    %v1435 = vunpack.c.l.b16 %v1371
    %v1436 = vunpack.c.l.b16 %v1372
    %v1437 = vunpack.c.l.b16 %v1373
    %v1438 = vunpack.c.l.b16 %v1374
    %v1439 = vunpack.c.h.b16 %v1371
    %v1440 = vunpack.c.h.b16 %v1372
    %v1441 = vunpack.c.h.b16 %v1373
    %v1442 = vunpack.c.h.b16 %v1374
    %v1443 = vunpack.c.l.b16 %v1375
    %v1444 = vunpack.c.l.b16 %v1376
    %v1445 = vunpack.c.l.b16 %v1377
    %v1446 = vunpack.c.l.b16 %v1378
    %v1447 = vunpack.c.h.b16 %v1375
    %v1448 = vunpack.c.h.b16 %v1376
    %v1449 = vunpack.c.h.b16 %v1377
    %v1450 = vunpack.c.h.b16 %v1378
    %v1451 = vunpack.c.l.b16 %v1379
    %v1452 = vunpack.c.l.b16 %v1380
    %v1453 = vunpack.c.l.b16 %v1381
    %v1454 = vunpack.c.l.b16 %v1382
    %v1455 = vunpack.c.h.b16 %v1379
    %v1456 = vunpack.c.h.b16 %v1380
    %v1457 = vunpack.c.h.b16 %v1381
    %v1458 = vunpack.c.h.b16 %v1382
    %v1459 = vunpack.c.l.b16 %v1383
    %v1460 = vunpack.c.l.b16 %v1384
    %v1461 = vunpack.c.l.b16 %v1385
    %v1462 = vunpack.c.l.b16 %v1386
    %v1463 = vunpack.c.h.b16 %v1383
    %v1464 = vunpack.c.h.b16 %v1384
    %v1465 = vunpack.c.h.b16 %v1385
    %v1466 = vunpack.c.h.b16 %v1386
    %v1467 = vunpack.c.l.b16 %v1387
    %v1468 = vunpack.c.l.b16 %v1388
    %v1469 = vunpack.c.l.b16 %v1389
    %v1470 = vunpack.c.l.b16 %v1390
    %v1471 = vunpack.c.h.b16 %v1387
    %v1472 = vunpack.c.h.b16 %v1388
    %v1473 = vunpack.c.h.b16 %v1389
    %v1474 = vunpack.c.h.b16 %v1390
    %v1475 = vunpack.c.l.b16 %v1391
    %v1476 = vunpack.c.l.b16 %v1392
    %v1477 = vunpack.c.l.b16 %v1393
    %v1478 = vunpack.c.l.b16 %v1394
    %v1479 = vunpack.c.h.b16 %v1391
    %v1480 = vunpack.c.h.b16 %v1392
    %v1481 = vunpack.c.h.b16 %v1393
    %v1482 = vunpack.c.h.b16 %v1394
    %v1483 = vunpack.c.l.b16 %v1395
    %v1484 = vunpack.c.l.b16 %v1396
    %v1485 = vunpack.c.l.b16 %v1397
    %v1486 = vunpack.c.l.b16 %v1398
    %v1487 = vunpack.c.h.b16 %v1395
    %v1488 = vunpack.c.h.b16 %v1396
    %v1489 = vunpack.c.h.b16 %v1397
    %v1490 = vunpack.c.h.b16 %v1398
    %v1491 = vunpack.c.l.b16 %v1399
    %v1492 = vunpack.c.l.b16 %v1400
    %v1493 = vunpack.c.l.b16 %v1401
    %v1494 = vunpack.c.l.b16 %v1402
    %v1495 = vunpack.c.h.b16 %v1399
    %v1496 = vunpack.c.h.b16 %v1400
    %v1497 = vunpack.c.h.b16 %v1401
    %v1498 = vunpack.c.h.b16 %v1402
    %v1499 = vpack.c.b16 %v1436, %v1435
    %v1500 = vpack.c.b16 %v1438, %v1437
    %v1501 = vpack.c.b16 %v1440, %v1439
    %v1502 = vpack.c.b16 %v1442, %v1441
    %v1503 = vpack.c.b16 %v1444, %v1443
    %v1504 = vpack.c.b16 %v1446, %v1445
    %v1505 = vpack.c.b16 %v1448, %v1447
    %v1506 = vpack.c.b16 %v1450, %v1449
    %v1507 = vpack.c.b16 %v1452, %v1451
    %v1508 = vpack.c.b16 %v1454, %v1453
    %v1509 = vpack.c.b16 %v1456, %v1455
    %v1510 = vpack.c.b16 %v1458, %v1457
    %v1511 = vpack.c.b16 %v1460, %v1459
    %v1512 = vpack.c.b16 %v1462, %v1461
    %v1513 = vpack.c.b16 %v1464, %v1463
    %v1514 = vpack.c.b16 %v1466, %v1465
    %v1515 = vpack.c.b16 %v1468, %v1467
    %v1516 = vpack.c.b16 %v1470, %v1469
    %v1517 = vpack.c.b16 %v1472, %v1471
    %v1518 = vpack.c.b16 %v1474, %v1473
    %v1519 = vpack.c.b16 %v1476, %v1475
    %v1520 = vpack.c.b16 %v1478, %v1477
    %v1521 = vpack.c.b16 %v1480, %v1479
    %v1522 = vpack.c.b16 %v1482, %v1481
    %v1523 = vpack.c.b16 %v1484, %v1483
    %v1524 = vpack.c.b16 %v1486, %v1485
    %v1525 = vpack.c.b16 %v1488, %v1487
    %v1526 = vpack.c.b16 %v1490, %v1489
    %v1527 = vpack.c.b16 %v1492, %v1491
    %v1528 = vpack.c.b16 %v1494, %v1493
    %v1529 = vpack.c.b16 %v1496, %v1495
    %v1530 = vpack.c.b16 %v1498, %v1497
    %1563 = vst [vmem:[#allocation13] sm:$0xff] %v1499
    %1564 = vst [vmem:[#allocation13 + $0x8] sm:$0xff] %v1500
    %1565 = vst [vmem:[#allocation13 + $0x10] sm:$0xff] %v1501
    %1566 = vst [vmem:[#allocation13 + $0x18] sm:$0xff] %v1502
    %1567 = vst [vmem:[#allocation13 + $0x20] sm:$0xff] %v1503
    %1568 = vst [vmem:[#allocation13 + $0x28] sm:$0xff] %v1504
    %1569 = vst [vmem:[#allocation13 + $0x30] sm:$0xff] %v1505
    %1570 = vst [vmem:[#allocation13 + $0x38] sm:$0xff] %v1506
    %1571 = vst [vmem:[#allocation13 + $0x40] sm:$0xff] %v1507
    %1572 = vst [vmem:[#allocation13 + $0x48] sm:$0xff] %v1508
    %1573 = vst [vmem:[#allocation13 + $0x50] sm:$0xff] %v1509
    %1574 = vst [vmem:[#allocation13 + $0x58] sm:$0xff] %v1510
    %1575 = vst [vmem:[#allocation13 + $0x60] sm:$0xff] %v1511
    %1576 = vst [vmem:[#allocation13 + $0x68] sm:$0xff] %v1512
    %1577 = vst [vmem:[#allocation13 + $0x70] sm:$0xff] %v1513
    %1578 = vst [vmem:[#allocation13 + $0x78] sm:$0xff] %v1514
    %1579 = vst [vmem:[#allocation13 + $0x80] sm:$0xff] %v1515
    %1580 = vst [vmem:[#allocation13 + $0x88] sm:$0xff] %v1516
    %1581 = vst [vmem:[#allocation13 + $0x90] sm:$0xff] %v1517
    %1582 = vst [vmem:[#allocation13 + $0x98] sm:$0xff] %v1518
    %1583 = vst [vmem:[#allocation13 + $0xa0] sm:$0xff] %v1519
    %1584 = vst [vmem:[#allocation13 + $0xa8] sm:$0xff] %v1520
    %1585 = vst [vmem:[#allocation13 + $0xb0] sm:$0xff] %v1521
    %1586 = vst [vmem:[#allocation13 + $0xb8] sm:$0xff] %v1522
    %1587 = vst [vmem:[#allocation13 + $0xc0] sm:$0xff] %v1523
    %1588 = vst [vmem:[#allocation13 + $0xc8] sm:$0xff] %v1524
    %1589 = vst [vmem:[#allocation13 + $0xd0] sm:$0xff] %v1525
    %1590 = vst [vmem:[#allocation13 + $0xd8] sm:$0xff] %v1526
    %1591 = vst [vmem:[#allocation13 + $0xe0] sm:$0xff] %v1527
    %1592 = vst [vmem:[#allocation13 + $0xe8] sm:$0xff] %v1528
    %1593 = vst [vmem:[#allocation13 + $0xf0] sm:$0xff] %v1529
    %1594 = vst [vmem:[#allocation13 + $0xf8] sm:$0xff] %v1530
    %v1595 = vld [vmem:[#allocation7] sm:$0xff]
    %v1596 = vld [vmem:[#allocation7 + $0x8] sm:$0xff]
    %v1597 = vld [vmem:[#allocation7 + $0x10] sm:$0xff]
    %v1598 = vld [vmem:[#allocation7 + $0x18] sm:$0xff]
    %v1599 = vld [vmem:[#allocation7 + $0x20] sm:$0xff]
    %v1600 = vld [vmem:[#allocation7 + $0x28] sm:$0xff]
    %v1601 = vld [vmem:[#allocation7 + $0x30] sm:$0xff]
    %v1602 = vld [vmem:[#allocation7 + $0x38] sm:$0xff]
    %v1603 = vld [vmem:[#allocation7 + $0x40] sm:$0xff]
    %v1604 = vld [vmem:[#allocation7 + $0x48] sm:$0xff]
    %v1605 = vld [vmem:[#allocation7 + $0x50] sm:$0xff]
    %v1606 = vld [vmem:[#allocation7 + $0x58] sm:$0xff]
    %v1607 = vld [vmem:[#allocation7 + $0x60] sm:$0xff]
    %v1608 = vld [vmem:[#allocation7 + $0x68] sm:$0xff]
    %v1609 = vld [vmem:[#allocation7 + $0x70] sm:$0xff]
    %v1610 = vld [vmem:[#allocation7 + $0x78] sm:$0xff]
    %v1627 = vunpack.c.l.b16 %v1595
    %v1628 = vunpack.c.h.b16 %v1595
    %v1629 = vunpack.c.l.b16 %v1596
    %v1630 = vunpack.c.h.b16 %v1596
    %v1631 = vunpack.c.l.b16 %v1597
    %v1632 = vunpack.c.h.b16 %v1597
    %v1633 = vunpack.c.l.b16 %v1598
    %v1634 = vunpack.c.h.b16 %v1598
    %v1635 = vunpack.c.l.b16 %v1599
    %v1636 = vunpack.c.h.b16 %v1599
    %v1637 = vunpack.c.l.b16 %v1600
    %v1638 = vunpack.c.h.b16 %v1600
    %v1639 = vunpack.c.l.b16 %v1601
    %v1640 = vunpack.c.h.b16 %v1601
    %v1641 = vunpack.c.l.b16 %v1602
    %v1642 = vunpack.c.h.b16 %v1602
    %v1643 = vunpack.c.l.b16 %v1603
    %v1644 = vunpack.c.h.b16 %v1603
    %v1645 = vunpack.c.l.b16 %v1604
    %v1646 = vunpack.c.h.b16 %v1604
    %v1647 = vunpack.c.l.b16 %v1605
    %v1648 = vunpack.c.h.b16 %v1605
    %v1649 = vunpack.c.l.b16 %v1606
    %v1650 = vunpack.c.h.b16 %v1606
    %v1651 = vunpack.c.l.b16 %v1607
    %v1652 = vunpack.c.h.b16 %v1607
    %v1653 = vunpack.c.l.b16 %v1608
    %v1654 = vunpack.c.h.b16 %v1608
    %v1655 = vunpack.c.l.b16 %v1609
    %v1656 = vunpack.c.h.b16 %v1609
    %v1657 = vunpack.c.l.b16 %v1610
    %v1658 = vunpack.c.h.b16 %v1610
    %v1659 = vpack.c.b16 %v1629, %v1627
    %v1660 = vpack.c.b16 %v1630, %v1628
    %v1661 = vpack.c.b16 %v1633, %v1631
    %v1662 = vpack.c.b16 %v1634, %v1632
    %v1663 = vpack.c.b16 %v1637, %v1635
    %v1664 = vpack.c.b16 %v1638, %v1636
    %v1665 = vpack.c.b16 %v1641, %v1639
    %v1666 = vpack.c.b16 %v1642, %v1640
    %v1667 = vpack.c.b16 %v1645, %v1643
    %v1668 = vpack.c.b16 %v1646, %v1644
    %v1669 = vpack.c.b16 %v1649, %v1647
    %v1670 = vpack.c.b16 %v1650, %v1648
    %v1671 = vpack.c.b16 %v1653, %v1651
    %v1672 = vpack.c.b16 %v1654, %v1652
    %v1673 = vpack.c.b16 %v1657, %v1655
    %v1674 = vpack.c.b16 %v1658, %v1656
    %1691 = vmatprep.subr.bf16.mxu0 %v1660
    %1692 = vmatpush1.bf16.msra.mxu0 %v1659
    %1693 = vmatprep.subr.bf16.mxu0 %v1662
    %1694 = vmatpush1.bf16.msra.mxu0 %v1661
    %1695 = vmatprep.subr.bf16.mxu0 %v1664
    %1696 = vmatpush1.bf16.msra.mxu0 %v1663
    %1697 = vmatprep.subr.bf16.mxu0 %v1666
    %1698 = vmatpush1.bf16.msra.mxu0 %v1665
    %1699 = vmatprep.subr.bf16.mxu0 %v1668
    %1700 = vmatpush1.bf16.msra.mxu0 %v1667
    %1701 = vmatprep.subr.bf16.mxu0 %v1670
    %1702 = vmatpush1.bf16.msra.mxu0 %v1669
    %1703 = vmatprep.subr.bf16.mxu0 %v1672
    %1704 = vmatpush1.bf16.msra.mxu0 %v1671
    %1705 = vmatprep.subr.bf16.mxu0 %v1674
    %1706 = vmatpush1.bf16.msra.mxu0 %v1673
    %1707 = vmatprep.subr.bf16.mxu0 0
    %1708 = vmatpush1.bf16.msra.mxu0 0
    %1709 = vmatprep.subr.bf16.mxu0 0
    %1710 = vmatpush1.bf16.msra.mxu0 0
    %1711 = vmatprep.subr.bf16.mxu0 0
    %1712 = vmatpush1.bf16.msra.mxu0 0
    %1713 = vmatprep.subr.bf16.mxu0 0
    %1714 = vmatpush1.bf16.msra.mxu0 0
    %1715 = vmatprep.subr.bf16.mxu0 0
    %1716 = vmatpush1.bf16.msra.mxu0 0
    %1717 = vmatprep.subr.bf16.mxu0 0
    %1718 = vmatpush1.bf16.msra.mxu0 0
    %1719 = vmatprep.subr.bf16.mxu0 0
    %1720 = vmatpush1.bf16.msra.mxu0 0
    %1721 = vmatprep.subr.bf16.mxu0 0
    %1722 = vmatpush1.bf16.msra.mxu0 0
    %1723 = vmatprep.mubr.bf16.mxu0 0
    %1724 = vmatmul.mubr.bf16.gmra.mrb[0].mxu0 %v319
    %v1725 = vpop.f32.mrb[0].mxu0
    %v1726 = vadd.f32 0.0, %v1725
    %v1727 = vpop.f32.mrb[0].mxu0
    %v1728 = vadd.f32 0.0, %v1727
    %v1729 = vpop.f32.mrb[0].mxu0
    %v1730 = vadd.f32 0.0, %v1729
    %v1731 = vpop.f32.mrb[0].mxu0
    %v1732 = vadd.f32 0.0, %v1731
    %1733 = vmatprep.mubr.bf16.mxu0 0
    %1734 = vmatmul.mubr.bf16.gmra.mrb[0].mxu0 %v320
    %v1735 = vpop.f32.mrb[0].mxu0
    %v1736 = vadd.f32 0.0, %v1735
    %v1737 = vpop.f32.mrb[0].mxu0
    %v1738 = vadd.f32 0.0, %v1737
    %v1739 = vpop.f32.mrb[0].mxu0
    %v1740 = vadd.f32 0.0, %v1739
    %v1741 = vpop.f32.mrb[0].mxu0
    %v1742 = vadd.f32 0.0, %v1741
    %1743 = vmatprep.mubr.bf16.mxu0 0
    %1744 = vmatmul.mubr.bf16.gmra.mrb[0].mxu0 %v321
    %v1745 = vpop.f32.mrb[0].mxu0
    %v1746 = vadd.f32 0.0, %v1745
    %v1747 = vpop.f32.mrb[0].mxu0
    %v1748 = vadd.f32 0.0, %v1747
    %v1749 = vpop.f32.mrb[0].mxu0
    %v1750 = vadd.f32 0.0, %v1749
    %v1751 = vpop.f32.mrb[0].mxu0
    %v1752 = vadd.f32 0.0, %v1751
    %1753 = vmatprep.mubr.bf16.mxu0 0
    %1754 = vmatmul.mubr.bf16.gmra.mrb[0].mxu0 %v322
    %v1755 = vpop.f32.mrb[0].mxu0
    %v1756 = vadd.f32 0.0, %v1755
    %v1757 = vpop.f32.mrb[0].mxu0
    %v1758 = vadd.f32 0.0, %v1757
    %v1759 = vpop.f32.mrb[0].mxu0
    %v1760 = vadd.f32 0.0, %v1759
    %v1761 = vpop.f32.mrb[0].mxu0
    %v1762 = vadd.f32 0.0, %v1761
    %1763 = vmatprep.mubr.bf16.mxu0 0
    %1764 = vmatmul.mubr.bf16.gmra.mrb[0].mxu0 %v323
    %v1765 = vpop.f32.mrb[0].mxu0
    %v1766 = vadd.f32 0.0, %v1765
    %v1767 = vpop.f32.mrb[0].mxu0
    %v1768 = vadd.f32 0.0, %v1767
    %v1769 = vpop.f32.mrb[0].mxu0
    %v1770 = vadd.f32 0.0, %v1769
    %v1771 = vpop.f32.mrb[0].mxu0
    %v1772 = vadd.f32 0.0, %v1771
    %1773 = vmatprep.mubr.bf16.mxu0 0
    %1774 = vmatmul.mubr.bf16.gmra.mrb[0].mxu0 %v324
    %v1775 = vpop.f32.mrb[0].mxu0
    %v1776 = vadd.f32 0.0, %v1775
    %v1777 = vpop.f32.mrb[0].mxu0
    %v1778 = vadd.f32 0.0, %v1777
    %v1779 = vpop.f32.mrb[0].mxu0
    %v1780 = vadd.f32 0.0, %v1779
    %v1781 = vpop.f32.mrb[0].mxu0
    %v1782 = vadd.f32 0.0, %v1781
    %1783 = vmatprep.mubr.bf16.mxu0 0
    %1784 = vmatmul.mubr.bf16.gmra.mrb[0].mxu0 %v325
    %v1785 = vpop.f32.mrb[0].mxu0
    %v1786 = vadd.f32 0.0, %v1785
    %v1787 = vpop.f32.mrb[0].mxu0
    %v1788 = vadd.f32 0.0, %v1787
    %v1789 = vpop.f32.mrb[0].mxu0
    %v1790 = vadd.f32 0.0, %v1789
    %v1791 = vpop.f32.mrb[0].mxu0
    %v1792 = vadd.f32 0.0, %v1791
    %1793 = vmatprep.mubr.bf16.mxu0 0
    %1794 = vmatmul.mubr.bf16.gmra.mrb[0].mxu0 %v326
    %v1795 = vpop.f32.mrb[0].mxu0
    %v1796 = vadd.f32 0.0, %v1795
    %v1797 = vpop.f32.mrb[0].mxu0
    %v1798 = vadd.f32 0.0, %v1797
    %v1799 = vpop.f32.mrb[0].mxu0
    %v1800 = vadd.f32 0.0, %v1799
    %v1801 = vpop.f32.mrb[0].mxu0
    %v1802 = vadd.f32 0.0, %v1801
    %1803 = vdwg.mxu0
    %1836 = vrot.lane.b32.xlu0 %v1726, 64
    %v1837 = vpop.permute.xlu0 %1836
    %1838 = vrot.lane.b32.xlu0 %v1728, 64
    %v1839 = vpop.permute.xlu0 %1838
    %1840 = vrot.lane.b32.xlu0 %v1730, 64
    %v1841 = vpop.permute.xlu0 %1840
    %1842 = vrot.lane.b32.xlu0 %v1732, 64
    %v1843 = vpop.permute.xlu0 %1842
    %1844 = vrot.lane.b32.xlu0 %v1736, 64
    %v1845 = vpop.permute.xlu0 %1844
    %1846 = vrot.lane.b32.xlu0 %v1738, 64
    %v1847 = vpop.permute.xlu0 %1846
    %1848 = vrot.lane.b32.xlu0 %v1740, 64
    %v1849 = vpop.permute.xlu0 %1848
    %1850 = vrot.lane.b32.xlu0 %v1742, 64
    %v1851 = vpop.permute.xlu0 %1850
    %1852 = vrot.lane.b32.xlu0 %v1746, 64
    %v1853 = vpop.permute.xlu0 %1852
    %1854 = vrot.lane.b32.xlu0 %v1748, 64
    %v1855 = vpop.permute.xlu0 %1854
    %1856 = vrot.lane.b32.xlu0 %v1750, 64
    %v1857 = vpop.permute.xlu0 %1856
    %1858 = vrot.lane.b32.xlu0 %v1752, 64
    %v1859 = vpop.permute.xlu0 %1858
    %1860 = vrot.lane.b32.xlu0 %v1756, 64
    %v1861 = vpop.permute.xlu0 %1860
    %1862 = vrot.lane.b32.xlu0 %v1758, 64
    %v1863 = vpop.permute.xlu0 %1862
    %1864 = vrot.lane.b32.xlu0 %v1760, 64
    %v1865 = vpop.permute.xlu0 %1864
    %1866 = vrot.lane.b32.xlu0 %v1762, 64
    %v1867 = vpop.permute.xlu0 %1866
    %1868 = vrot.lane.b32.xlu0 %v1766, 64
    %v1869 = vpop.permute.xlu0 %1868
    %1870 = vrot.lane.b32.xlu0 %v1768, 64
    %v1871 = vpop.permute.xlu0 %1870
    %1872 = vrot.lane.b32.xlu0 %v1770, 64
    %v1873 = vpop.permute.xlu0 %1872
    %1874 = vrot.lane.b32.xlu0 %v1772, 64
    %v1875 = vpop.permute.xlu0 %1874
    %1876 = vrot.lane.b32.xlu0 %v1776, 64
    %v1877 = vpop.permute.xlu0 %1876
    %1878 = vrot.lane.b32.xlu0 %v1778, 64
    %v1879 = vpop.permute.xlu0 %1878
    %1880 = vrot.lane.b32.xlu0 %v1780, 64
    %v1881 = vpop.permute.xlu0 %1880
    %1882 = vrot.lane.b32.xlu0 %v1782, 64
    %v1883 = vpop.permute.xlu0 %1882
    %1884 = vrot.lane.b32.xlu0 %v1786, 64
    %v1885 = vpop.permute.xlu0 %1884
    %1886 = vrot.lane.b32.xlu0 %v1788, 64
    %v1887 = vpop.permute.xlu0 %1886
    %1888 = vrot.lane.b32.xlu0 %v1790, 64
    %v1889 = vpop.permute.xlu0 %1888
    %1890 = vrot.lane.b32.xlu0 %v1792, 64
    %v1891 = vpop.permute.xlu0 %1890
    %1892 = vrot.lane.b32.xlu0 %v1796, 64
    %v1893 = vpop.permute.xlu0 %1892
    %1894 = vrot.lane.b32.xlu0 %v1798, 64
    %v1895 = vpop.permute.xlu0 %1894
    %1896 = vrot.lane.b32.xlu0 %v1800, 64
    %v1897 = vpop.permute.xlu0 %1896
    %1898 = vrot.lane.b32.xlu0 %v1802, 64
    %v1899 = vpop.permute.xlu0 %1898
    %v1900 = vsel %vm913, %v1837, %v1839
    %v1901 = vsel %vm913, %v1841, %v1843
    %v1902 = vsel %vm913, %v1845, %v1847
    %v1903 = vsel %vm913, %v1849, %v1851
    %v1904 = vsel %vm913, %v1853, %v1855
    %v1905 = vsel %vm913, %v1857, %v1859
    %v1906 = vsel %vm913, %v1861, %v1863
    %v1907 = vsel %vm913, %v1865, %v1867
    %v1908 = vsel %vm913, %v1869, %v1871
    %v1909 = vsel %vm913, %v1873, %v1875
    %v1910 = vsel %vm913, %v1877, %v1879
    %v1911 = vsel %vm913, %v1881, %v1883
    %v1912 = vsel %vm913, %v1885, %v1887
    %v1913 = vsel %vm913, %v1889, %v1891
    %v1914 = vsel %vm913, %v1893, %v1895
    %v1915 = vsel %vm913, %v1897, %v1899
    %v1964 = vsel %vm913, %v1839, %v1837
    %v1965 = vsel %vm913, %v1843, %v1841
    %v1966 = vsel %vm913, %v1847, %v1845
    %v1967 = vsel %vm913, %v1851, %v1849
    %v1968 = vsel %vm913, %v1855, %v1853
    %v1969 = vsel %vm913, %v1859, %v1857
    %v1970 = vsel %vm913, %v1863, %v1861
    %v1971 = vsel %vm913, %v1867, %v1865
    %v1972 = vsel %vm913, %v1871, %v1869
    %v1973 = vsel %vm913, %v1875, %v1873
    %v1974 = vsel %vm913, %v1879, %v1877
    %v1975 = vsel %vm913, %v1883, %v1881
    %v1976 = vsel %vm913, %v1887, %v1885
    %v1977 = vsel %vm913, %v1891, %v1889
    %v1978 = vsel %vm913, %v1895, %v1893
    %v1979 = vsel %vm913, %v1899, %v1897
    %v1980 = vsel %vm1111, %v1900, %v1964
    %v1981 = vsel %vm1112, %v1964, %v1900
    %v1982 = vsel %vm1111, %v1901, %v1965
    %v1983 = vsel %vm1112, %v1965, %v1901
    %v1984 = vsel %vm1111, %v1902, %v1966
    %v1985 = vsel %vm1112, %v1966, %v1902
    %v1986 = vsel %vm1111, %v1903, %v1967
    %v1987 = vsel %vm1112, %v1967, %v1903
    %v1988 = vsel %vm1111, %v1904, %v1968
    %v1989 = vsel %vm1112, %v1968, %v1904
    %v1990 = vsel %vm1111, %v1905, %v1969
    %v1991 = vsel %vm1112, %v1969, %v1905
    %v1992 = vsel %vm1111, %v1906, %v1970
    %v1993 = vsel %vm1112, %v1970, %v1906
    %v1994 = vsel %vm1111, %v1907, %v1971
    %v1995 = vsel %vm1112, %v1971, %v1907
    %v1996 = vsel %vm1111, %v1908, %v1972
    %v1997 = vsel %vm1112, %v1972, %v1908
    %v1998 = vsel %vm1111, %v1909, %v1973
    %v1999 = vsel %vm1112, %v1973, %v1909
    %v2000 = vsel %vm1111, %v1910, %v1974
    %v2001 = vsel %vm1112, %v1974, %v1910
    %v2002 = vsel %vm1111, %v1911, %v1975
    %v2003 = vsel %vm1112, %v1975, %v1911
    %v2004 = vsel %vm1111, %v1912, %v1976
    %v2005 = vsel %vm1112, %v1976, %v1912
    %v2006 = vsel %vm1111, %v1913, %v1977
    %v2007 = vsel %vm1112, %v1977, %v1913
    %v2008 = vsel %vm1111, %v1914, %v1978
    %v2009 = vsel %vm1112, %v1978, %v1914
    %v2010 = vsel %vm1111, %v1915, %v1979
    %v2011 = vsel %vm1112, %v1979, %v1915
    %v2012 = vmul.f32 %v1726, %v127
    %v2013 = vmul.f32 %v1728, %v128
    %v2014 = vmul.f32 %v1730, %v131
    %v2015 = vmul.f32 %v1732, %v132
    %v2016 = vmul.f32 %v1736, %v135
    %v2017 = vmul.f32 %v1738, %v136
    %v2018 = vmul.f32 %v1740, %v139
    %v2019 = vmul.f32 %v1742, %v140
    %v2020 = vmul.f32 %v1746, %v143
    %v2021 = vmul.f32 %v1748, %v144
    %v2022 = vmul.f32 %v1750, %v147
    %v2023 = vmul.f32 %v1752, %v148
    %v2024 = vmul.f32 %v1756, %v151
    %v2025 = vmul.f32 %v1758, %v152
    %v2026 = vmul.f32 %v1760, %v155
    %v2027 = vmul.f32 %v1762, %v156
    %v2028 = vmul.f32 %v1766, %v159
    %v2029 = vmul.f32 %v1768, %v160
    %v2030 = vmul.f32 %v1770, %v163
    %v2031 = vmul.f32 %v1772, %v164
    %v2032 = vmul.f32 %v1776, %v167
    %v2033 = vmul.f32 %v1778, %v168
    %v2034 = vmul.f32 %v1780, %v171
    %v2035 = vmul.f32 %v1782, %v172
    %v2036 = vmul.f32 %v1786, %v175
    %v2037 = vmul.f32 %v1788, %v176
    %v2038 = vmul.f32 %v1790, %v179
    %v2039 = vmul.f32 %v1792, %v180
    %v2040 = vmul.f32 %v1796, %v183
    %v2041 = vmul.f32 %v1798, %v184
    %v2042 = vmul.f32 %v1800, %v187
    %v2043 = vmul.f32 %v1802, %v188
    %v2044 = vmul.f32 %v1980, %v191
    %v2045 = vmul.f32 %v1981, %v192
    %v2046 = vmul.f32 %v1982, %v195
    %v2047 = vmul.f32 %v1983, %v196
    %v2048 = vmul.f32 %v1984, %v199
    %v2049 = vmul.f32 %v1985, %v200
    %v2050 = vmul.f32 %v1986, %v203
    %v2051 = vmul.f32 %v1987, %v204
    %v2052 = vmul.f32 %v1988, %v207
    %v2053 = vmul.f32 %v1989, %v208
    %v2054 = vmul.f32 %v1990, %v211
    %v2055 = vmul.f32 %v1991, %v212
    %v2056 = vmul.f32 %v1992, %v215
    %v2057 = vmul.f32 %v1993, %v216
    %v2058 = vmul.f32 %v1994, %v219
    %v2059 = vmul.f32 %v1995, %v220
    %v2060 = vmul.f32 %v1996, %v223
    %v2061 = vmul.f32 %v1997, %v224
    %v2062 = vmul.f32 %v1998, %v227
    %v2063 = vmul.f32 %v1999, %v228
    %v2064 = vmul.f32 %v2000, %v231
    %v2065 = vmul.f32 %v2001, %v232
    %v2066 = vmul.f32 %v2002, %v235
    %v2067 = vmul.f32 %v2003, %v236
    %v2068 = vmul.f32 %v2004, %v239
    %v2069 = vmul.f32 %v2005, %v240
    %v2070 = vmul.f32 %v2006, %v243
    %v2071 = vmul.f32 %v2007, %v244
    %v2072 = vmul.f32 %v2008, %v247
    %v2073 = vmul.f32 %v2009, %v248
    %v2074 = vmul.f32 %v2010, %v251
    %v2075 = vmul.f32 %v2011, %v252
    %v2076 = vadd.f32 %v2012, %v2044
    %v2077 = vadd.f32 %v2013, %v2045
    %v2078 = vadd.f32 %v2014, %v2046
    %v2079 = vadd.f32 %v2015, %v2047
    %v2080 = vadd.f32 %v2016, %v2048
    %v2081 = vadd.f32 %v2017, %v2049
    %v2082 = vadd.f32 %v2018, %v2050
    %v2083 = vadd.f32 %v2019, %v2051
    %v2084 = vadd.f32 %v2020, %v2052
    %v2085 = vadd.f32 %v2021, %v2053
    %v2086 = vadd.f32 %v2022, %v2054
    %v2087 = vadd.f32 %v2023, %v2055
    %v2088 = vadd.f32 %v2024, %v2056
    %v2089 = vadd.f32 %v2025, %v2057
    %v2090 = vadd.f32 %v2026, %v2058
    %v2091 = vadd.f32 %v2027, %v2059
    %v2092 = vadd.f32 %v2028, %v2060
    %v2093 = vadd.f32 %v2029, %v2061
    %v2094 = vadd.f32 %v2030, %v2062
    %v2095 = vadd.f32 %v2031, %v2063
    %v2096 = vadd.f32 %v2032, %v2064
    %v2097 = vadd.f32 %v2033, %v2065
    %v2098 = vadd.f32 %v2034, %v2066
    %v2099 = vadd.f32 %v2035, %v2067
    %v2100 = vadd.f32 %v2036, %v2068
    %v2101 = vadd.f32 %v2037, %v2069
    %v2102 = vadd.f32 %v2038, %v2070
    %v2103 = vadd.f32 %v2039, %v2071
    %v2104 = vadd.f32 %v2040, %v2072
    %v2105 = vadd.f32 %v2041, %v2073
    %v2106 = vadd.f32 %v2042, %v2074
    %v2107 = vadd.f32 %v2043, %v2075
    %v2108 = vpack.c.bf16 %v2078, %v2076
    %v2109 = vpack.c.bf16 %v2079, %v2077
    %v2110 = vpack.c.bf16 %v2082, %v2080
    %v2111 = vpack.c.bf16 %v2083, %v2081
    %v2112 = vpack.c.bf16 %v2086, %v2084
    %v2113 = vpack.c.bf16 %v2087, %v2085
    %v2114 = vpack.c.bf16 %v2090, %v2088
    %v2115 = vpack.c.bf16 %v2091, %v2089
    %v2116 = vpack.c.bf16 %v2094, %v2092
    %v2117 = vpack.c.bf16 %v2095, %v2093
    %v2118 = vpack.c.bf16 %v2098, %v2096
    %v2119 = vpack.c.bf16 %v2099, %v2097
    %v2120 = vpack.c.bf16 %v2102, %v2100
    %v2121 = vpack.c.bf16 %v2103, %v2101
    %v2122 = vpack.c.bf16 %v2106, %v2104
    %v2123 = vpack.c.bf16 %v2107, %v2105
    %v2140 = vunpack.c.l.b16 %v2108
    %v2141 = vunpack.c.l.b16 %v2109
    %v2142 = vunpack.c.h.b16 %v2108
    %v2143 = vunpack.c.h.b16 %v2109
    %v2144 = vunpack.c.l.b16 %v2110
    %v2145 = vunpack.c.l.b16 %v2111
    %v2146 = vunpack.c.h.b16 %v2110
    %v2147 = vunpack.c.h.b16 %v2111
    %v2148 = vunpack.c.l.b16 %v2112
    %v2149 = vunpack.c.l.b16 %v2113
    %v2150 = vunpack.c.h.b16 %v2112
    %v2151 = vunpack.c.h.b16 %v2113
    %v2152 = vunpack.c.l.b16 %v2114
    %v2153 = vunpack.c.l.b16 %v2115
    %v2154 = vunpack.c.h.b16 %v2114
    %v2155 = vunpack.c.h.b16 %v2115
    %v2156 = vunpack.c.l.b16 %v2116
    %v2157 = vunpack.c.l.b16 %v2117
    %v2158 = vunpack.c.h.b16 %v2116
    %v2159 = vunpack.c.h.b16 %v2117
    %v2160 = vunpack.c.l.b16 %v2118
    %v2161 = vunpack.c.l.b16 %v2119
    %v2162 = vunpack.c.h.b16 %v2118
    %v2163 = vunpack.c.h.b16 %v2119
    %v2164 = vunpack.c.l.b16 %v2120
    %v2165 = vunpack.c.l.b16 %v2121
    %v2166 = vunpack.c.h.b16 %v2120
    %v2167 = vunpack.c.h.b16 %v2121
    %v2168 = vunpack.c.l.b16 %v2122
    %v2169 = vunpack.c.l.b16 %v2123
    %v2170 = vunpack.c.h.b16 %v2122
    %v2171 = vunpack.c.h.b16 %v2123
    %v2172 = vpack.c.b16 %v2141, %v2140
    %v2173 = vpack.c.b16 %v2143, %v2142
    %v2174 = vpack.c.b16 %v2145, %v2144
    %v2175 = vpack.c.b16 %v2147, %v2146
    %v2176 = vpack.c.b16 %v2149, %v2148
    %v2177 = vpack.c.b16 %v2151, %v2150
    %v2178 = vpack.c.b16 %v2153, %v2152
    %v2179 = vpack.c.b16 %v2155, %v2154
    %v2180 = vpack.c.b16 %v2157, %v2156
    %v2181 = vpack.c.b16 %v2159, %v2158
    %v2182 = vpack.c.b16 %v2161, %v2160
    %v2183 = vpack.c.b16 %v2163, %v2162
    %v2184 = vpack.c.b16 %v2165, %v2164
    %v2185 = vpack.c.b16 %v2167, %v2166
    %v2186 = vpack.c.b16 %v2169, %v2168
    %v2187 = vpack.c.b16 %v2171, %v2170
    %2204 = vst [vmem:[#allocation14] sm:$0xff] %v2172
    %2205 = vst [vmem:[#allocation14 + $0x8] sm:$0xff] %v2173
    %2206 = vst [vmem:[#allocation14 + $0x10] sm:$0xff] %v2174
    %2207 = vst [vmem:[#allocation14 + $0x18] sm:$0xff] %v2175
    %2208 = vst [vmem:[#allocation14 + $0x20] sm:$0xff] %v2176
    %2209 = vst [vmem:[#allocation14 + $0x28] sm:$0xff] %v2177
    %2210 = vst [vmem:[#allocation14 + $0x30] sm:$0xff] %v2178
    %2211 = vst [vmem:[#allocation14 + $0x38] sm:$0xff] %v2179
    %2212 = vst [vmem:[#allocation14 + $0x40] sm:$0xff] %v2180
    %2213 = vst [vmem:[#allocation14 + $0x48] sm:$0xff] %v2181
    %2214 = vst [vmem:[#allocation14 + $0x50] sm:$0xff] %v2182
    %2215 = vst [vmem:[#allocation14 + $0x58] sm:$0xff] %v2183
    %2216 = vst [vmem:[#allocation14 + $0x60] sm:$0xff] %v2184
    %2217 = vst [vmem:[#allocation14 + $0x68] sm:$0xff] %v2185
    %2218 = vst [vmem:[#allocation14 + $0x70] sm:$0xff] %v2186
    %2219 = vst [vmem:[#allocation14 + $0x78] sm:$0xff] %v2187
    %v2220 = vld [vmem:[#allocation8] sm:$0xff]
    %v2221 = vld [vmem:[#allocation8 + $0x8] sm:$0xff]
    %v2222 = vld [vmem:[#allocation8 + $0x10] sm:$0xff]
    %v2223 = vld [vmem:[#allocation8 + $0x18] sm:$0xff]
    %v2224 = vld [vmem:[#allocation8 + $0x20] sm:$0xff]
    %v2225 = vld [vmem:[#allocation8 + $0x28] sm:$0xff]
    %v2226 = vld [vmem:[#allocation8 + $0x30] sm:$0xff]
    %v2227 = vld [vmem:[#allocation8 + $0x38] sm:$0xff]
    %v2228 = vld [vmem:[#allocation8 + $0x40] sm:$0xff]
    %v2229 = vld [vmem:[#allocation8 + $0x48] sm:$0xff]
    %v2230 = vld [vmem:[#allocation8 + $0x50] sm:$0xff]
    %v2231 = vld [vmem:[#allocation8 + $0x58] sm:$0xff]
    %v2232 = vld [vmem:[#allocation8 + $0x60] sm:$0xff]
    %v2233 = vld [vmem:[#allocation8 + $0x68] sm:$0xff]
    %v2234 = vld [vmem:[#allocation8 + $0x70] sm:$0xff]
    %v2235 = vld [vmem:[#allocation8 + $0x78] sm:$0xff]
    %v2252 = vunpack.c.l.b16 %v2220
    %v2253 = vunpack.c.h.b16 %v2220
    %v2254 = vunpack.c.l.b16 %v2221
    %v2255 = vunpack.c.h.b16 %v2221
    %v2256 = vunpack.c.l.b16 %v2222
    %v2257 = vunpack.c.h.b16 %v2222
    %v2258 = vunpack.c.l.b16 %v2223
    %v2259 = vunpack.c.h.b16 %v2223
    %v2260 = vunpack.c.l.b16 %v2224
    %v2261 = vunpack.c.h.b16 %v2224
    %v2262 = vunpack.c.l.b16 %v2225
    %v2263 = vunpack.c.h.b16 %v2225
    %v2264 = vunpack.c.l.b16 %v2226
    %v2265 = vunpack.c.h.b16 %v2226
    %v2266 = vunpack.c.l.b16 %v2227
    %v2267 = vunpack.c.h.b16 %v2227
    %v2268 = vunpack.c.l.b16 %v2228
    %v2269 = vunpack.c.h.b16 %v2228
    %v2270 = vunpack.c.l.b16 %v2229
    %v2271 = vunpack.c.h.b16 %v2229
    %v2272 = vunpack.c.l.b16 %v2230
    %v2273 = vunpack.c.h.b16 %v2230
    %v2274 = vunpack.c.l.b16 %v2231
    %v2275 = vunpack.c.h.b16 %v2231
    %v2276 = vunpack.c.l.b16 %v2232
    %v2277 = vunpack.c.h.b16 %v2232
    %v2278 = vunpack.c.l.b16 %v2233
    %v2279 = vunpack.c.h.b16 %v2233
    %v2280 = vunpack.c.l.b16 %v2234
    %v2281 = vunpack.c.h.b16 %v2234
    %v2282 = vunpack.c.l.b16 %v2235
    %v2283 = vunpack.c.h.b16 %v2235
    %v2284 = vpack.c.b16 %v2254, %v2252
    %v2285 = vpack.c.b16 %v2255, %v2253
    %v2286 = vpack.c.b16 %v2258, %v2256
    %v2287 = vpack.c.b16 %v2259, %v2257
    %v2288 = vpack.c.b16 %v2262, %v2260
    %v2289 = vpack.c.b16 %v2263, %v2261
    %v2290 = vpack.c.b16 %v2266, %v2264
    %v2291 = vpack.c.b16 %v2267, %v2265
    %v2292 = vpack.c.b16 %v2270, %v2268
    %v2293 = vpack.c.b16 %v2271, %v2269
    %v2294 = vpack.c.b16 %v2274, %v2272
    %v2295 = vpack.c.b16 %v2275, %v2273
    %v2296 = vpack.c.b16 %v2278, %v2276
    %v2297 = vpack.c.b16 %v2279, %v2277
    %v2298 = vpack.c.b16 %v2282, %v2280
    %v2299 = vpack.c.b16 %v2283, %v2281
    %2316 = vmatprep.subr.bf16.mxu0 %v2285
    %2317 = vmatpush1.bf16.msra.mxu0 %v2284
    %2318 = vmatprep.subr.bf16.mxu0 %v2287
    %2319 = vmatpush1.bf16.msra.mxu0 %v2286
    %2320 = vmatprep.subr.bf16.mxu0 %v2289
    %2321 = vmatpush1.bf16.msra.mxu0 %v2288
    %2322 = vmatprep.subr.bf16.mxu0 %v2291
    %2323 = vmatpush1.bf16.msra.mxu0 %v2290
    %2324 = vmatprep.subr.bf16.mxu0 %v2293
    %2325 = vmatpush1.bf16.msra.mxu0 %v2292
    %2326 = vmatprep.subr.bf16.mxu0 %v2295
    %2327 = vmatpush1.bf16.msra.mxu0 %v2294
    %2328 = vmatprep.subr.bf16.mxu0 %v2297
    %2329 = vmatpush1.bf16.msra.mxu0 %v2296
    %2330 = vmatprep.subr.bf16.mxu0 %v2299
    %2331 = vmatpush1.bf16.msra.mxu0 %v2298
    %2332 = vmatprep.subr.bf16.mxu0 0
    %2333 = vmatpush1.bf16.msra.mxu0 0
    %2334 = vmatprep.subr.bf16.mxu0 0
    %2335 = vmatpush1.bf16.msra.mxu0 0
    %2336 = vmatprep.subr.bf16.mxu0 0
    %2337 = vmatpush1.bf16.msra.mxu0 0
    %2338 = vmatprep.subr.bf16.mxu0 0
    %2339 = vmatpush1.bf16.msra.mxu0 0
    %2340 = vmatprep.subr.bf16.mxu0 0
    %2341 = vmatpush1.bf16.msra.mxu0 0
    %2342 = vmatprep.subr.bf16.mxu0 0
    %2343 = vmatpush1.bf16.msra.mxu0 0
    %2344 = vmatprep.subr.bf16.mxu0 0
    %2345 = vmatpush1.bf16.msra.mxu0 0
    %2346 = vmatprep.subr.bf16.mxu0 0
    %2347 = vmatpush1.bf16.msra.mxu0 0
    %2348 = vmatprep.mubr.bf16.mxu0 0
    %2349 = vmatmul.mubr.bf16.gmra.mrb[0].mxu0 %v319
    %v2350 = vpop.f32.mrb[0].mxu0
    %v2351 = vadd.f32 0.0, %v2350
    %v2352 = vpop.f32.mrb[0].mxu0
    %v2353 = vadd.f32 0.0, %v2352
    %v2354 = vpop.f32.mrb[0].mxu0
    %v2355 = vadd.f32 0.0, %v2354
    %v2356 = vpop.f32.mrb[0].mxu0
    %v2357 = vadd.f32 0.0, %v2356
    %2358 = vmatprep.mubr.bf16.mxu0 0
    %2359 = vmatmul.mubr.bf16.gmra.mrb[0].mxu0 %v320
    %v2360 = vpop.f32.mrb[0].mxu0
    %v2361 = vadd.f32 0.0, %v2360
    %v2362 = vpop.f32.mrb[0].mxu0
    %v2363 = vadd.f32 0.0, %v2362
    %v2364 = vpop.f32.mrb[0].mxu0
    %v2365 = vadd.f32 0.0, %v2364
    %v2366 = vpop.f32.mrb[0].mxu0
    %v2367 = vadd.f32 0.0, %v2366
    %2368 = vmatprep.mubr.bf16.mxu0 0
    %2369 = vmatmul.mubr.bf16.gmra.mrb[0].mxu0 %v321
    %v2370 = vpop.f32.mrb[0].mxu0
    %v2371 = vadd.f32 0.0, %v2370
    %v2372 = vpop.f32.mrb[0].mxu0
    %v2373 = vadd.f32 0.0, %v2372
    %v2374 = vpop.f32.mrb[0].mxu0
    %v2375 = vadd.f32 0.0, %v2374
    %v2376 = vpop.f32.mrb[0].mxu0
    %v2377 = vadd.f32 0.0, %v2376
    %2378 = vmatprep.mubr.bf16.mxu0 0
    %2379 = vmatmul.mubr.bf16.gmra.mrb[0].mxu0 %v322
    %v2380 = vpop.f32.mrb[0].mxu0
    %v2381 = vadd.f32 0.0, %v2380
    %v2382 = vpop.f32.mrb[0].mxu0
    %v2383 = vadd.f32 0.0, %v2382
    %v2384 = vpop.f32.mrb[0].mxu0
    %v2385 = vadd.f32 0.0, %v2384
    %v2386 = vpop.f32.mrb[0].mxu0
    %v2387 = vadd.f32 0.0, %v2386
    %2388 = vmatprep.mubr.bf16.mxu0 0
    %2389 = vmatmul.mubr.bf16.gmra.mrb[0].mxu0 %v323
    %v2390 = vpop.f32.mrb[0].mxu0
    %v2391 = vadd.f32 0.0, %v2390
    %v2392 = vpop.f32.mrb[0].mxu0
    %v2393 = vadd.f32 0.0, %v2392
    %v2394 = vpop.f32.mrb[0].mxu0
    %v2395 = vadd.f32 0.0, %v2394
    %v2396 = vpop.f32.mrb[0].mxu0
    %v2397 = vadd.f32 0.0, %v2396
    %2398 = vmatprep.mubr.bf16.mxu0 0
    %2399 = vmatmul.mubr.bf16.gmra.mrb[0].mxu0 %v324
    %v2400 = vpop.f32.mrb[0].mxu0
    %v2401 = vadd.f32 0.0, %v2400
    %v2402 = vpop.f32.mrb[0].mxu0
    %v2403 = vadd.f32 0.0, %v2402
    %v2404 = vpop.f32.mrb[0].mxu0
    %v2405 = vadd.f32 0.0, %v2404
    %v2406 = vpop.f32.mrb[0].mxu0
    %v2407 = vadd.f32 0.0, %v2406
    %2408 = vmatprep.mubr.bf16.mxu0 0
    %2409 = vmatmul.mubr.bf16.gmra.mrb[0].mxu0 %v325
    %v2410 = vpop.f32.mrb[0].mxu0
    %v2411 = vadd.f32 0.0, %v2410
    %v2412 = vpop.f32.mrb[0].mxu0
    %v2413 = vadd.f32 0.0, %v2412
    %v2414 = vpop.f32.mrb[0].mxu0
    %v2415 = vadd.f32 0.0, %v2414
    %v2416 = vpop.f32.mrb[0].mxu0
    %v2417 = vadd.f32 0.0, %v2416
    %2418 = vmatprep.mubr.bf16.mxu0 0
    %2419 = vmatmul.mubr.bf16.gmra.mrb[0].mxu0 %v326
    %v2420 = vpop.f32.mrb[0].mxu0
    %v2421 = vadd.f32 0.0, %v2420
    %v2422 = vpop.f32.mrb[0].mxu0
    %v2423 = vadd.f32 0.0, %v2422
    %v2424 = vpop.f32.mrb[0].mxu0
    %v2425 = vadd.f32 0.0, %v2424
    %v2426 = vpop.f32.mrb[0].mxu0
    %v2427 = vadd.f32 0.0, %v2426
    %2428 = vdwg.mxu0
    %v2429 = vpack.c.bf16 %v2355, %v2351
    %v2430 = vpack.c.bf16 %v2357, %v2353
    %v2431 = vpack.c.bf16 %v2365, %v2361
    %v2432 = vpack.c.bf16 %v2367, %v2363
    %v2433 = vpack.c.bf16 %v2375, %v2371
    %v2434 = vpack.c.bf16 %v2377, %v2373
    %v2435 = vpack.c.bf16 %v2385, %v2381
    %v2436 = vpack.c.bf16 %v2387, %v2383
    %v2437 = vpack.c.bf16 %v2395, %v2391
    %v2438 = vpack.c.bf16 %v2397, %v2393
    %v2439 = vpack.c.bf16 %v2405, %v2401
    %v2440 = vpack.c.bf16 %v2407, %v2403
    %v2441 = vpack.c.bf16 %v2415, %v2411
    %v2442 = vpack.c.bf16 %v2417, %v2413
    %v2443 = vpack.c.bf16 %v2425, %v2421
    %v2444 = vpack.c.bf16 %v2427, %v2423
    %v2461 = vunpack.c.l.b16 %v2429
    %v2462 = vunpack.c.l.b16 %v2430
    %v2463 = vunpack.c.h.b16 %v2429
    %v2464 = vunpack.c.h.b16 %v2430
    %v2465 = vunpack.c.l.b16 %v2431
    %v2466 = vunpack.c.l.b16 %v2432
    %v2467 = vunpack.c.h.b16 %v2431
    %v2468 = vunpack.c.h.b16 %v2432
    %v2469 = vunpack.c.l.b16 %v2433
    %v2470 = vunpack.c.l.b16 %v2434
    %v2471 = vunpack.c.h.b16 %v2433
    %v2472 = vunpack.c.h.b16 %v2434
    %v2473 = vunpack.c.l.b16 %v2435
    %v2474 = vunpack.c.l.b16 %v2436
    %v2475 = vunpack.c.h.b16 %v2435
    %v2476 = vunpack.c.h.b16 %v2436
    %v2477 = vunpack.c.l.b16 %v2437
    %v2478 = vunpack.c.l.b16 %v2438
    %v2479 = vunpack.c.h.b16 %v2437
    %v2480 = vunpack.c.h.b16 %v2438
    %v2481 = vunpack.c.l.b16 %v2439
    %v2482 = vunpack.c.l.b16 %v2440
    %v2483 = vunpack.c.h.b16 %v2439
    %v2484 = vunpack.c.h.b16 %v2440
    %v2485 = vunpack.c.l.b16 %v2441
    %v2486 = vunpack.c.l.b16 %v2442
    %v2487 = vunpack.c.h.b16 %v2441
    %v2488 = vunpack.c.h.b16 %v2442
    %v2489 = vunpack.c.l.b16 %v2443
    %v2490 = vunpack.c.l.b16 %v2444
    %v2491 = vunpack.c.h.b16 %v2443
    %v2492 = vunpack.c.h.b16 %v2444
    %v2493 = vpack.c.b16 %v2462, %v2461
    %v2494 = vpack.c.b16 %v2464, %v2463
    %v2495 = vpack.c.b16 %v2466, %v2465
    %v2496 = vpack.c.b16 %v2468, %v2467
    %v2497 = vpack.c.b16 %v2470, %v2469
    %v2498 = vpack.c.b16 %v2472, %v2471
    %v2499 = vpack.c.b16 %v2474, %v2473
    %v2500 = vpack.c.b16 %v2476, %v2475
    %v2501 = vpack.c.b16 %v2478, %v2477
    %v2502 = vpack.c.b16 %v2480, %v2479
    %v2503 = vpack.c.b16 %v2482, %v2481
    %v2504 = vpack.c.b16 %v2484, %v2483
    %v2505 = vpack.c.b16 %v2486, %v2485
    %v2506 = vpack.c.b16 %v2488, %v2487
    %v2507 = vpack.c.b16 %v2490, %v2489
    %v2508 = vpack.c.b16 %v2492, %v2491
    %2525 = vst [vmem:[#allocation16] sm:$0xff] %v2493
    %2526 = vst [vmem:[#allocation16 + $0x8] sm:$0xff] %v2494
    %2527 = vst [vmem:[#allocation16 + $0x10] sm:$0xff] %v2495
    %2528 = vst [vmem:[#allocation16 + $0x18] sm:$0xff] %v2496
    %2529 = vst [vmem:[#allocation16 + $0x20] sm:$0xff] %v2497
    %2530 = vst [vmem:[#allocation16 + $0x28] sm:$0xff] %v2498
    %2531 = vst [vmem:[#allocation16 + $0x30] sm:$0xff] %v2499
    %2532 = vst [vmem:[#allocation16 + $0x38] sm:$0xff] %v2500
    %2533 = vst [vmem:[#allocation16 + $0x40] sm:$0xff] %v2501
    %2534 = vst [vmem:[#allocation16 + $0x48] sm:$0xff] %v2502
    %2535 = vst [vmem:[#allocation16 + $0x50] sm:$0xff] %v2503
    %2536 = vst [vmem:[#allocation16 + $0x58] sm:$0xff] %v2504
    %2537 = vst [vmem:[#allocation16 + $0x60] sm:$0xff] %v2505
    %2538 = vst [vmem:[#allocation16 + $0x68] sm:$0xff] %v2506
    %2539 = vst [vmem:[#allocation16 + $0x70] sm:$0xff] %v2507
    %2540 = vst [vmem:[#allocation16 + $0x78] sm:$0xff] %v2508
    // Predicated region
    $region50: #{tpu_custom_call.1} parent=1 // pred_check
      _
    $region51: #{tpu_custom_call.1} parent=1 // pred_check_branch
      %2542 = sbr.rel (0) target = $region53
    $region52: #{tpu_custom_call.1} parent=1 // pred_region
      %s2544 = ssub.s32 4096, 4096
      %2545 = vsyncadd [#allocation4], %s2544
      %s2546 = sshll.u32 [#allocation13], 4
      %s2547 = int_to_ptr.vmem [resolvable:$true] %s2546
      %2552 = dma.vmem_to_hbm [thread:$0]  %s2547, 4096, %s6, [#allocation4], 256, 256, 16
    $region53: #{tpu_custom_call.1} parent=1 // pred_fallthru
      _
    // Predicated region
    $region54: #{tpu_custom_call.1} parent=1 // pred_check
      _
    $region55: #{tpu_custom_call.1} parent=1 // pred_check_branch
      %2554 = sbr.rel (0) target = $region57
    $region56: #{tpu_custom_call.1} parent=1 // pred_region
      %s2556 = ssub.s32 2048, 2048
      %2557 = vsyncadd [#allocation15], %s2556
      %s2558 = sshll.u32 [#allocation14], 4
      %s2559 = int_to_ptr.vmem [resolvable:$true] %s2558
      %2564 = dma.vmem_to_hbm [thread:$0]  %s2559, 2048, %s7, [#allocation15], 128, 128, 8
    $region57: #{tpu_custom_call.1} parent=1 // pred_fallthru
      _
    // Predicated region
    $region58: #{tpu_custom_call.1} parent=1 // pred_check
      _
    $region59: #{tpu_custom_call.1} parent=1 // pred_check_branch
      %2566 = sbr.rel (0) target = $region61
    $region60: #{tpu_custom_call.1} parent=1 // pred_region
      %s2568 = ssub.s32 2048, 2048
      %2569 = vsyncadd [#allocation15], %s2568
      %s2570 = sshll.u32 [#allocation16], 4
      %s2571 = int_to_ptr.vmem [resolvable:$true] %s2570
      %2576 = dma.vmem_to_hbm [thread:$0]  %s2571, 2048, %s8, [#allocation15], 128, 128, 8
    $region61: #{tpu_custom_call.1} parent=1 // pred_fallthru
      _
    // Predicated region
    $region62: #{tpu_custom_call.1} parent=1 // pred_check
      _
    $region63: #{tpu_custom_call.1} parent=1 // pred_check_branch
      %2578 = sbr.rel (0) target = $region65
    $region64: #{tpu_custom_call.1} parent=1 // pred_region
      %2579 = dma.done [#allocation4], 4096
    $region65: #{tpu_custom_call.1} parent=1 // pred_fallthru
      _
    // Predicated region
    $region66: #{tpu_custom_call.1} parent=1 // pred_check
      _
    $region67: #{tpu_custom_call.1} parent=1 // pred_check_branch
      %2581 = sbr.rel (0) target = $region69
    $region68: #{tpu_custom_call.1} parent=1 // pred_region
      %2582 = dma.done [#allocation15], 2048
    $region69: #{tpu_custom_call.1} parent=1 // pred_fallthru
      _
    // Predicated region
    $region70: #{tpu_custom_call.1} parent=1 // pred_check
      _
    $region71: #{tpu_custom_call.1} parent=1 // pred_check_branch
      %2584 = sbr.rel (0) target = $region73
    $region72: #{tpu_custom_call.1} parent=1 // pred_region
      %2585 = dma.done [#allocation15], 2048
    $region73: #{tpu_custom_call.1} parent=1 // pred_fallthru
      _
    %2586 = vsyncpa [#allocation3], 1
    %2587 = vsyncpa [#allocation6], 1
    %2588 = vsyncpa [#allocation9], 1
    %2589 = vsyncpa [#allocation12], 1
    %2590 = vsyncpa [#allocation4], 1
    %2591 = vsyncpa [#allocation15], 1

</llo_original>
